<compile_context>
chip_gen: v6e
topology: v6e:2x2x1
jax: 0.10.0
libtpu: 0.0.40
codegen_flags: <defaults>
</compile_context>

<pallas_src>
import functools

import jax
import jax.numpy as jnp
from jax.experimental import pallas as pl
from jax.experimental.pallas import tpu as pltpu

EPS = 1e-5
KH = KW = 3


def _dense_block_kernel(cin, cout, x_ref, t1_ref, t2_ref, vec_ref, o_ref, mid_ref):
    """Fused DenseBlock forward on (H, W*C)-layout slabs.

    x_ref:   (N, H,  W*Cin)         input images, lane axis = W*Cin
    t1_ref:  (KH, W*Cin,   W1*Cout) banded conv1 weights (one slab per kernel row)
    t2_ref:  (KH, W1*Cout, W2*Cout) banded conv2 weights
    vec_ref: (2, 3, W*Cin)          per-stage [gamma, beta, bias], lane-tiled
    o_ref:   (N, H2, W2*Cout)       output, lane axis = W2*Cout
    mid_ref: (N, H1, W1*Cout)       VMEM scratch holding the stage-1 activation
    """

    def stage(src_ref, t_ref, v, ch, dst_ref):
        n, h, l = src_ref.shape              # l = win * ch
        ho = h - (KH - 1)
        lout = t_ref.shape[-1]               # wout * ch_out
        count = n * h * (l // ch)            # N * H * W elements per channel

        # --- BatchNorm statistics: one vectorized pass over the batch slab ---
        xb = src_ref[...]                                                   # (n, h, l)
        colsum = jnp.sum(jnp.sum(xb, axis=0), axis=0, keepdims=True)        # (1, l)
        colsq = jnp.sum(jnp.sum(xb * xb, axis=0), axis=0, keepdims=True)    # (1, l)
        stats = jnp.concatenate([colsum, colsq], axis=0)                    # (2, l)

        # Collapse the per-(w, c) lane sums into per-channel values and
        # broadcast them straight back onto the (w, c) lane pattern with
        # channel masks (exact, stays lane-dense, no lane<->sublane relayout).
        lane = jax.lax.broadcasted_iota(jnp.int32, (1, l), 1)
        stats_t = jnp.zeros_like(stats)
        for c in range(ch):                                                 # ch == 4
            m = ((lane & (ch - 1)) == c).astype(jnp.float32)                # (1, l)
            s_c = jnp.sum(stats * m, axis=1, keepdims=True)                 # (2, 1)
            stats_t = stats_t + s_c * m
        stats_t = stats_t * (1.0 / count)
        mean_t = stats_t[0:1, :]
        var_t = stats_t[1:2, :] - mean_t * mean_t                           # biased var

        # --- Fold BN into a per-lane affine: xn = a*x + b ---------------------
        a_t = v[0:1, :l] * jax.lax.rsqrt(var_t + EPS)                       # gamma * rstd
        b_t = v[1:2, :l] - mean_t * a_t                                     # beta - mean*a
        bias_t = v[2:3, :lout]                                              # conv bias (tiled)

        t_blk = [t_ref[ki] for ki in range(KH)]                             # (l, lout) each

        # --- 3x3 VALID conv as KH accumulated banded matmuls + bias + ReLU ---
        for i in range(n):
            xn = src_ref[i] * a_t + b_t                                     # (h, l)
            acc = jnp.dot(xn[0:ho, :], t_blk[0],
                          preferred_element_type=jnp.float32)
            for ki in range(1, KH):
                acc = acc + jnp.dot(xn[ki:ki + ho, :], t_blk[ki],
                                    preferred_element_type=jnp.float32)
            dst_ref[i] = jnp.maximum(acc + bias_t, 0.0).astype(dst_ref.dtype)

    stage(x_ref, t1_ref, vec_ref[0], cin, mid_ref)     # BN -> conv1 -> ReLU
    stage(mid_ref, t2_ref, vec_ref[1], cout, o_ref)    # BN -> conv2 -> ReLU


def _build_banded_weights(w_hwio, win):
    """T[ki][(j+kj)*Cin+ci, j*Cout+co] = w[ki, kj, ci, co]  (block-Toeplitz)."""
    kh, kw, cin, cout = w_hwio.shape
    wout = win - kw + 1
    rows = []
    for ki in range(kh):
        t = jnp.zeros((win * cin, wout * cout), jnp.float32)
        for kj in range(kw):
            band = jnp.eye(win, wout, k=-kj, dtype=jnp.float32)
            t = t + jnp.kron(band, w_hwio[ki, kj])
        rows.append(t)
    return jnp.stack(rows)                                # (KH, win*cin, wout*cout)


@jax.jit
def dense_block_forward(x_nchw, params):
    """DenseBlock forward.  x_nchw: (N, C, H, W) -> (N, C_out, H-4, W-4)."""
    n, c, h, w = x_nchw.shape
    p1, p2 = params["conv1"], params["conv2"]
    cout = p1["bias"].shape[0]
    assert c & (c - 1) == 0 and cout & (cout - 1) == 0, "channels must be 2^k"

    # NCHW -> NHWC -> lane-dense (N, H, W*C) slabs (contiguous reshape).
    x3 = jnp.transpose(x_nchw, (0, 2, 3, 1)).reshape(n, h, w * c)

    w1 = p1["w_flat"].reshape(KH, KW, c, cout)
    w2 = p2["w_flat"].reshape(KH, KW, cout, cout)
    t1 = _build_banded_weights(w1, w)                     # (3, w*c,        (w-2)*cout)
    t2 = _build_banded_weights(w2, w - (KW - 1))          # (3, (w-2)*cout, (w-4)*cout)

    # Pack per-stage (gamma, beta, bias), pre-tiled onto the lane layout.
    lmax = w * c

    def pack(gamma, beta, bias, win, wout):
        rows = [jnp.tile(gamma, win), jnp.tile(beta, win), jnp.tile(bias, wout)]
        return jnp.stack([jnp.pad(r, (0, lmax - r.shape[0])) for r in rows])

    vec = jnp.stack([
        pack(p1["bn_gamma"], p1["bn_beta"], p1["bias"], w, w - (KW - 1)),
        pack(p2["bn_gamma"], p2["bn_beta"], p2["bias"],
             w - (KW - 1), w - 2 * (KW - 1)),
    ]).astype(jnp.float32)                                # (2, 3, lmax)

    h1, w1o = h - (KH - 1), w - (KW - 1)                  # stage-1 output size
    ho, wo = h - 2 * (KH - 1), w - 2 * (KW - 1)           # stage-2 output size
    full = lambda shape: pl.BlockSpec(shape, lambda: (0,) * len(shape))

    out3 = pl.pallas_call(
        functools.partial(_dense_block_kernel, c, cout),
        out_shape=jax.ShapeDtypeStruct((n, ho, wo * cout), jnp.float32),
        in_specs=[full(x3.shape), full(t1.shape), full(t2.shape), full(vec.shape)],
        out_specs=full((n, ho, wo * cout)),
        scratch_shapes=[pltpu.VMEM((n, h1, w1o * cout), jnp.float32)],
        compiler_params=pltpu.CompilerParams(vmem_limit_bytes=4 << 20),
    )(x3, t1, t2, vec)

    # (N, Ho, Wo*Cout) -> (N, Ho, Wo, Cout) -> NCHW
    return jnp.transpose(out3.reshape(n, ho, wo, cout), (0, 3, 1, 2))


# ----------------------------- pure-JAX reference -----------------------------
def _reference_dense_conv(x_nhwc, gamma, beta, w_flat, bias):
    cin = x_nhwc.shape[-1]
    cout = w_flat.shape[1]
    mean = jnp.mean(x_nhwc, axis=(0, 1, 2), keepdims=True)
    var = jnp.mean((x_nhwc - mean) ** 2, axis=(0, 1, 2), keepdims=True)
    xn = (x_nhwc - mean) * jax.lax.rsqrt(var + EPS) * gamma + beta
    w_hwio = w_flat.reshape(KH, KW, cin, cout)
    y = jax.lax.conv_general_dilated(
        xn, w_hwio, window_strides=(1, 1), padding="VALID",
        dimension_numbers=("NHWC", "HWIO", "NHWC"))
    return jnp.maximum(y + bias, 0.0)


def _reference_forward(x_nchw, params):
    x = jnp.transpose(x_nchw, (0, 2, 3, 1))
    for layer in ("conv1", "conv2"):
        p = params[layer]
        x = _reference_dense_conv(x, p["bn_gamma"], p["bn_beta"], p["w_flat"], p["bias"])
    return jnp.transpose(x, (0, 3, 1, 2))


def init_params(key, in_channels, out_channels):
    """Deterministic synthetic parameters (BN: gamma=1, beta=0; conv: scaled normal)."""
    params = {}
    for layer, cin, cout in (("conv1", in_channels, out_channels),
                             ("conv2", out_channels, out_channels)):
        key, kw_, kb = jax.random.split(key, 3)
        # conv weight laid out as (KH, KW, Cin, Cout) flattened to (KH*KW*Cin, Cout)
        wgt = 0.1 * jax.random.normal(kw_, (KH, KW, cin, cout), dtype=jnp.float32)
        b = 0.1 * jax.random.normal(kb, (cout,), dtype=jnp.float32)
        params[layer] = dict(
            bn_gamma=jnp.ones((cin,), jnp.float32),
            bn_beta=jnp.zeros((cin,), jnp.float32),
            w_flat=wgt.reshape(KH * KW * cin, cout),
            bias=b,
        )
    return params


if __name__ == "__main__":
    key = jax.random.PRNGKey(0)
    k_x, k_p = jax.random.split(key)

    N, C, H, W = 2, 4, 16, 16          # in_channels == out_channels == 4 (see notes)
    x = jax.random.normal(k_x, (N, C, H, W), dtype=jnp.float32)
    params = init_params(k_p, in_channels=C, out_channels=C)

    out = dense_block_forward(x, params)
    out = jax.block_until_ready(out)

    ref = _reference_forward(x, params)
    assert out.shape == (N, C, H - 4, W - 4), out.shape
    assert jnp.allclose(out, ref, atol=1e-4, rtol=1e-4), "mismatch vs JAX reference"

    print("KERNEL_OK")
</pallas_src>

<mosaic_0001>
module attributes {stable_mosaic.version = 11 : i64} {
  func.func @_dense_block_kernel(%arg0: memref<2x16x64xf32, #tpu.memory_space<vmem>>, %arg1: memref<3x64x56xf32, #tpu.memory_space<vmem>>, %arg2: memref<3x56x48xf32, #tpu.memory_space<vmem>>, %arg3: memref<2x3x64xf32, #tpu.memory_space<vmem>>, %arg4: memref<2x12x48xf32, #tpu.memory_space<vmem>>, %arg5: memref<2x14x56xf32, #tpu.memory_space<vmem>>) attributes {dimension_semantics = [], scalar_prefetch = 0 : i64, scratch_operands = 1 : i64, tpu.core_type = #tpu.core_type<tc>} {
    %c0 = arith.constant 0 : index
    %c0_0 = arith.constant 0 : index
    %c0_1 = arith.constant 0 : index
    %0 = vector.load %arg3[%c0, %c0_0, %c0_1] : memref<2x3x64xf32, #tpu.memory_space<vmem>>, vector<1x3x64xf32>
    %1 = vector.shape_cast %0 : vector<1x3x64xf32> to vector<3x64xf32>
    %c0_2 = arith.constant 0 : index
    %c0_3 = arith.constant 0 : index
    %c0_4 = arith.constant 0 : index
    %2 = vector.load %arg0[%c0_2, %c0_3, %c0_4] : memref<2x16x64xf32, #tpu.memory_space<vmem>>, vector<2x16x64xf32>
    %cst = arith.constant dense<0.000000e+00> : vector<16x64xf32>
    %3 = vector.multi_reduction <add>, %2, %cst [0] : vector<2x16x64xf32> to vector<16x64xf32>
    %cst_5 = arith.constant dense<0.000000e+00> : vector<64xf32>
    %4 = vector.multi_reduction <add>, %3, %cst_5 [0] : vector<16x64xf32> to vector<64xf32>
    %5 = vector.shape_cast %4 : vector<64xf32> to vector<1x64xf32>
    %6 = arith.mulf %2, %2 : vector<2x16x64xf32>
    %cst_6 = arith.constant dense<0.000000e+00> : vector<16x64xf32>
    %7 = vector.multi_reduction <add>, %6, %cst_6 [0] : vector<2x16x64xf32> to vector<16x64xf32>
    %cst_7 = arith.constant dense<0.000000e+00> : vector<64xf32>
    %8 = vector.multi_reduction <add>, %7, %cst_7 [0] : vector<16x64xf32> to vector<64xf32>
    %9 = vector.shape_cast %8 : vector<64xf32> to vector<1x64xf32>
    %10 = tpu.concatenate %5, %9 in 0 : vector<1x64xf32>, vector<1x64xf32> -> vector<2x64xf32>
    %11 = tpu.iota {dimensions = array<i32: 1>} : vector<1x64xi32>
    %cst_8 = arith.constant 0.000000e+00 : f32
    %12 = vector.broadcast %cst_8 : f32 to vector<2x64xf32>
    %c3_i32 = arith.constant 3 : i32
    %13 = vector.broadcast %c3_i32 : i32 to vector<1x64xi32>
    %14 = arith.andi %11, %13 : vector<1x64xi32>
    %c0_i32 = arith.constant 0 : i32
    %15 = vector.broadcast %c0_i32 : i32 to vector<1x64xi32>
    %16 = arith.cmpi eq, %14, %15 : vector<1x64xi32>
    %17 = arith.extui %16 : vector<1x64xi1> to vector<1x64xi32>
    %18 = arith.sitofp %17 : vector<1x64xi32> to vector<1x64xf32>
    %19 = vector.broadcast %18 : vector<1x64xf32> to vector<2x64xf32>
    %20 = arith.mulf %10, %19 : vector<2x64xf32>
    %cst_9 = arith.constant dense<0.000000e+00> : vector<2xf32>
    %21 = vector.multi_reduction <add>, %20, %cst_9 [1] : vector<2x64xf32> to vector<2xf32>
    %22 = vector.shape_cast %21 : vector<2xf32> to vector<2x1xf32>
    %23 = vector.broadcast %22 : vector<2x1xf32> to vector<2x64xf32>
    %24 = vector.broadcast %18 : vector<1x64xf32> to vector<2x64xf32>
    %25 = arith.mulf %23, %24 : vector<2x64xf32>
    %26 = arith.addf %12, %25 : vector<2x64xf32>
    %c3_i32_10 = arith.constant 3 : i32
    %27 = vector.broadcast %c3_i32_10 : i32 to vector<1x64xi32>
    %28 = arith.andi %11, %27 : vector<1x64xi32>
    %c1_i32 = arith.constant 1 : i32
    %29 = vector.broadcast %c1_i32 : i32 to vector<1x64xi32>
    %30 = arith.cmpi eq, %28, %29 : vector<1x64xi32>
    %31 = arith.extui %30 : vector<1x64xi1> to vector<1x64xi32>
    %32 = arith.sitofp %31 : vector<1x64xi32> to vector<1x64xf32>
    %33 = vector.broadcast %32 : vector<1x64xf32> to vector<2x64xf32>
    %34 = arith.mulf %10, %33 : vector<2x64xf32>
    %cst_11 = arith.constant dense<0.000000e+00> : vector<2xf32>
    %35 = vector.multi_reduction <add>, %34, %cst_11 [1] : vector<2x64xf32> to vector<2xf32>
    %36 = vector.shape_cast %35 : vector<2xf32> to vector<2x1xf32>
    %37 = vector.broadcast %36 : vector<2x1xf32> to vector<2x64xf32>
    %38 = vector.broadcast %32 : vector<1x64xf32> to vector<2x64xf32>
    %39 = arith.mulf %37, %38 : vector<2x64xf32>
    %40 = arith.addf %26, %39 : vector<2x64xf32>
    %c3_i32_12 = arith.constant 3 : i32
    %41 = vector.broadcast %c3_i32_12 : i32 to vector<1x64xi32>
    %42 = arith.andi %11, %41 : vector<1x64xi32>
    %c2_i32 = arith.constant 2 : i32
    %43 = vector.broadcast %c2_i32 : i32 to vector<1x64xi32>
    %44 = arith.cmpi eq, %42, %43 : vector<1x64xi32>
    %45 = arith.extui %44 : vector<1x64xi1> to vector<1x64xi32>
    %46 = arith.sitofp %45 : vector<1x64xi32> to vector<1x64xf32>
    %47 = vector.broadcast %46 : vector<1x64xf32> to vector<2x64xf32>
    %48 = arith.mulf %10, %47 : vector<2x64xf32>
    %cst_13 = arith.constant dense<0.000000e+00> : vector<2xf32>
    %49 = vector.multi_reduction <add>, %48, %cst_13 [1] : vector<2x64xf32> to vector<2xf32>
    %50 = vector.shape_cast %49 : vector<2xf32> to vector<2x1xf32>
    %51 = vector.broadcast %50 : vector<2x1xf32> to vector<2x64xf32>
    %52 = vector.broadcast %46 : vector<1x64xf32> to vector<2x64xf32>
    %53 = arith.mulf %51, %52 : vector<2x64xf32>
    %54 = arith.addf %40, %53 : vector<2x64xf32>
    %c3_i32_14 = arith.constant 3 : i32
    %55 = vector.broadcast %c3_i32_14 : i32 to vector<1x64xi32>
    %56 = arith.andi %11, %55 : vector<1x64xi32>
    %c3_i32_15 = arith.constant 3 : i32
    %57 = vector.broadcast %c3_i32_15 : i32 to vector<1x64xi32>
    %58 = arith.cmpi eq, %56, %57 : vector<1x64xi32>
    %59 = arith.extui %58 : vector<1x64xi1> to vector<1x64xi32>
    %60 = arith.sitofp %59 : vector<1x64xi32> to vector<1x64xf32>
    %61 = vector.broadcast %60 : vector<1x64xf32> to vector<2x64xf32>
    %62 = arith.mulf %10, %61 : vector<2x64xf32>
    %cst_16 = arith.constant dense<0.000000e+00> : vector<2xf32>
    %63 = vector.multi_reduction <add>, %62, %cst_16 [1] : vector<2x64xf32> to vector<2xf32>
    %64 = vector.shape_cast %63 : vector<2xf32> to vector<2x1xf32>
    %65 = vector.broadcast %64 : vector<2x1xf32> to vector<2x64xf32>
    %66 = vector.broadcast %60 : vector<1x64xf32> to vector<2x64xf32>
    %67 = arith.mulf %65, %66 : vector<2x64xf32>
    %68 = arith.addf %54, %67 : vector<2x64xf32>
    %cst_17 = arith.constant 0.001953125 : f32
    %69 = vector.broadcast %cst_17 : f32 to vector<2x64xf32>
    %70 = arith.mulf %68, %69 : vector<2x64xf32>
    %71 = vector.extract_strided_slice %70 {offsets = [0, 0], sizes = [1, 64], strides = [1, 1]} : vector<2x64xf32> to vector<1x64xf32>
    %72 = vector.extract_strided_slice %70 {offsets = [1, 0], sizes = [1, 64], strides = [1, 1]} : vector<2x64xf32> to vector<1x64xf32>
    %73 = arith.mulf %71, %71 : vector<1x64xf32>
    %74 = arith.subf %72, %73 : vector<1x64xf32>
    %75 = vector.extract_strided_slice %1 {offsets = [0, 0], sizes = [1, 64], strides = [1, 1]} : vector<3x64xf32> to vector<1x64xf32>
    %cst_18 = arith.constant 9.99999974E-6 : f32
    %76 = vector.broadcast %cst_18 : f32 to vector<1x64xf32>
    %77 = arith.addf %74, %76 : vector<1x64xf32>
    %78 = math.rsqrt %77 : vector<1x64xf32>
    %79 = arith.mulf %75, %78 : vector<1x64xf32>
    %80 = vector.extract_strided_slice %1 {offsets = [1, 0], sizes = [1, 64], strides = [1, 1]} : vector<3x64xf32> to vector<1x64xf32>
    %81 = arith.mulf %71, %79 : vector<1x64xf32>
    %82 = arith.subf %80, %81 : vector<1x64xf32>
    %83 = vector.extract_strided_slice %1 {offsets = [2, 0], sizes = [1, 56], strides = [1, 1]} : vector<3x64xf32> to vector<1x56xf32>
    %c0_19 = arith.constant 0 : index
    %c0_20 = arith.constant 0 : index
    %c0_21 = arith.constant 0 : index
    %84 = vector.load %arg1[%c0_19, %c0_20, %c0_21] : memref<3x64x56xf32, #tpu.memory_space<vmem>>, vector<1x64x56xf32>
    %85 = vector.shape_cast %84 : vector<1x64x56xf32> to vector<64x56xf32>
    %c1 = arith.constant 1 : index
    %c0_22 = arith.constant 0 : index
    %c0_23 = arith.constant 0 : index
    %86 = vector.load %arg1[%c1, %c0_22, %c0_23] : memref<3x64x56xf32, #tpu.memory_space<vmem>>, vector<1x64x56xf32>
    %87 = vector.shape_cast %86 : vector<1x64x56xf32> to vector<64x56xf32>
    %c2 = arith.constant 2 : index
    %c0_24 = arith.constant 0 : index
    %c0_25 = arith.constant 0 : index
    %88 = vector.load %arg1[%c2, %c0_24, %c0_25] : memref<3x64x56xf32, #tpu.memory_space<vmem>>, vector<1x64x56xf32>
    %89 = vector.shape_cast %88 : vector<1x64x56xf32> to vector<64x56xf32>
    %c0_26 = arith.constant 0 : index
    %c0_27 = arith.constant 0 : index
    %c0_28 = arith.constant 0 : index
    %90 = vector.load %arg0[%c0_26, %c0_27, %c0_28] : memref<2x16x64xf32, #tpu.memory_space<vmem>>, vector<1x16x64xf32>
    %91 = vector.shape_cast %90 : vector<1x16x64xf32> to vector<16x64xf32>
    %92 = vector.broadcast %79 : vector<1x64xf32> to vector<16x64xf32>
    %93 = arith.mulf %91, %92 : vector<16x64xf32>
    %94 = vector.broadcast %82 : vector<1x64xf32> to vector<16x64xf32>
    %95 = arith.addf %93, %94 : vector<16x64xf32>
    %96 = vector.extract_strided_slice %95 {offsets = [0, 0], sizes = [14, 64], strides = [1, 1]} : vector<16x64xf32> to vector<14x64xf32>
    %cst_29 = arith.constant dense<0.000000e+00> : vector<14x56xf32>
    %97 = tpu.matmul %96, %85, %cst_29 {dimension_numbers = #tpu.dot_dimension_numbers<[1], [0], [0], [1], [0, 0, 1, 1], [], []>} : vector<14x64xf32>, vector<64x56xf32>, vector<14x56xf32> -> vector<14x56xf32>
    %98 = vector.extract_strided_slice %95 {offsets = [1, 0], sizes = [14, 64], strides = [1, 1]} : vector<16x64xf32> to vector<14x64xf32>
    %cst_30 = arith.constant dense<0.000000e+00> : vector<14x56xf32>
    %99 = tpu.matmul %98, %87, %cst_30 {dimension_numbers = #tpu.dot_dimension_numbers<[1], [0], [0], [1], [0, 0, 1, 1], [], []>} : vector<14x64xf32>, vector<64x56xf32>, vector<14x56xf32> -> vector<14x56xf32>
    %100 = arith.addf %97, %99 : vector<14x56xf32>
    %101 = vector.extract_strided_slice %95 {offsets = [2, 0], sizes = [14, 64], strides = [1, 1]} : vector<16x64xf32> to vector<14x64xf32>
    %cst_31 = arith.constant dense<0.000000e+00> : vector<14x56xf32>
    %102 = tpu.matmul %101, %89, %cst_31 {dimension_numbers = #tpu.dot_dimension_numbers<[1], [0], [0], [1], [0, 0, 1, 1], [], []>} : vector<14x64xf32>, vector<64x56xf32>, vector<14x56xf32> -> vector<14x56xf32>
    %103 = arith.addf %100, %102 : vector<14x56xf32>
    %104 = vector.broadcast %83 : vector<1x56xf32> to vector<14x56xf32>
    %105 = arith.addf %103, %104 : vector<14x56xf32>
    %cst_32 = arith.constant 0.000000e+00 : f32
    %106 = vector.broadcast %cst_32 : f32 to vector<14x56xf32>
    %107 = arith.maximumf %105, %106 : vector<14x56xf32>
    %c0_33 = arith.constant 0 : index
    %c0_34 = arith.constant 0 : index
    %c0_35 = arith.constant 0 : index
    %108 = vector.load %arg5[%c0_33, %c0_34, %c0_35] : memref<2x14x56xf32, #tpu.memory_space<vmem>>, vector<1x14x56xf32>
    %109 = vector.shape_cast %108 : vector<1x14x56xf32> to vector<14x56xf32>
    %110 = vector.shape_cast %107 : vector<14x56xf32> to vector<1x14x56xf32>
    tpu.vector_store %arg5[%c0_33, %c0_34, %c0_35], %110 {strides = array<i32>} : memref<2x14x56xf32, #tpu.memory_space<vmem>>, vector<1x14x56xf32>,
    %c1_36 = arith.constant 1 : index
    %c0_37 = arith.constant 0 : index
    %c0_38 = arith.constant 0 : index
    %111 = vector.load %arg0[%c1_36, %c0_37, %c0_38] : memref<2x16x64xf32, #tpu.memory_space<vmem>>, vector<1x16x64xf32>
    %112 = vector.shape_cast %111 : vector<1x16x64xf32> to vector<16x64xf32>
    %113 = vector.broadcast %79 : vector<1x64xf32> to vector<16x64xf32>
    %114 = arith.mulf %112, %113 : vector<16x64xf32>
    %115 = vector.broadcast %82 : vector<1x64xf32> to vector<16x64xf32>
    %116 = arith.addf %114, %115 : vector<16x64xf32>
    %117 = vector.extract_strided_slice %116 {offsets = [0, 0], sizes = [14, 64], strides = [1, 1]} : vector<16x64xf32> to vector<14x64xf32>
    %cst_39 = arith.constant dense<0.000000e+00> : vector<14x56xf32>
    %118 = tpu.matmul %117, %85, %cst_39 {dimension_numbers = #tpu.dot_dimension_numbers<[1], [0], [0], [1], [0, 0, 1, 1], [], []>} : vector<14x64xf32>, vector<64x56xf32>, vector<14x56xf32> -> vector<14x56xf32>
    %119 = vector.extract_strided_slice %116 {offsets = [1, 0], sizes = [14, 64], strides = [1, 1]} : vector<16x64xf32> to vector<14x64xf32>
    %cst_40 = arith.constant dense<0.000000e+00> : vector<14x56xf32>
    %120 = tpu.matmul %119, %87, %cst_40 {dimension_numbers = #tpu.dot_dimension_numbers<[1], [0], [0], [1], [0, 0, 1, 1], [], []>} : vector<14x64xf32>, vector<64x56xf32>, vector<14x56xf32> -> vector<14x56xf32>
    %121 = arith.addf %118, %120 : vector<14x56xf32>
    %122 = vector.extract_strided_slice %116 {offsets = [2, 0], sizes = [14, 64], strides = [1, 1]} : vector<16x64xf32> to vector<14x64xf32>
    %cst_41 = arith.constant dense<0.000000e+00> : vector<14x56xf32>
    %123 = tpu.matmul %122, %89, %cst_41 {dimension_numbers = #tpu.dot_dimension_numbers<[1], [0], [0], [1], [0, 0, 1, 1], [], []>} : vector<14x64xf32>, vector<64x56xf32>, vector<14x56xf32> -> vector<14x56xf32>
    %124 = arith.addf %121, %123 : vector<14x56xf32>
    %125 = vector.broadcast %83 : vector<1x56xf32> to vector<14x56xf32>
    %126 = arith.addf %124, %125 : vector<14x56xf32>
    %cst_42 = arith.constant 0.000000e+00 : f32
    %127 = vector.broadcast %cst_42 : f32 to vector<14x56xf32>
    %128 = arith.maximumf %126, %127 : vector<14x56xf32>
    %c1_43 = arith.constant 1 : index
    %c0_44 = arith.constant 0 : index
    %c0_45 = arith.constant 0 : index
    %129 = vector.load %arg5[%c1_43, %c0_44, %c0_45] : memref<2x14x56xf32, #tpu.memory_space<vmem>>, vector<1x14x56xf32>
    %130 = vector.shape_cast %129 : vector<1x14x56xf32> to vector<14x56xf32>
    %131 = vector.shape_cast %128 : vector<14x56xf32> to vector<1x14x56xf32>
    tpu.vector_store %arg5[%c1_43, %c0_44, %c0_45], %131 {strides = array<i32>} : memref<2x14x56xf32, #tpu.memory_space<vmem>>, vector<1x14x56xf32>,
    %c1_46 = arith.constant 1 : index
    %c0_47 = arith.constant 0 : index
    %c0_48 = arith.constant 0 : index
    %132 = vector.load %arg3[%c1_46, %c0_47, %c0_48] : memref<2x3x64xf32, #tpu.memory_space<vmem>>, vector<1x3x64xf32>
    %133 = vector.shape_cast %132 : vector<1x3x64xf32> to vector<3x64xf32>
    %c0_49 = arith.constant 0 : index
    %c0_50 = arith.constant 0 : index
    %c0_51 = arith.constant 0 : index
    %134 = vector.load %arg5[%c0_49, %c0_50, %c0_51] : memref<2x14x56xf32, #tpu.memory_space<vmem>>, vector<2x14x56xf32>
    %cst_52 = arith.constant dense<0.000000e+00> : vector<14x56xf32>
    %135 = vector.multi_reduction <add>, %134, %cst_52 [0] : vector<2x14x56xf32> to vector<14x56xf32>
    %cst_53 = arith.constant dense<0.000000e+00> : vector<56xf32>
    %136 = vector.multi_reduction <add>, %135, %cst_53 [0] : vector<14x56xf32> to vector<56xf32>
    %137 = vector.shape_cast %136 : vector<56xf32> to vector<1x56xf32>
    %138 = arith.mulf %134, %134 : vector<2x14x56xf32>
    %cst_54 = arith.constant dense<0.000000e+00> : vector<14x56xf32>
    %139 = vector.multi_reduction <add>, %138, %cst_54 [0] : vector<2x14x56xf32> to vector<14x56xf32>
    %cst_55 = arith.constant dense<0.000000e+00> : vector<56xf32>
    %140 = vector.multi_reduction <add>, %139, %cst_55 [0] : vector<14x56xf32> to vector<56xf32>
    %141 = vector.shape_cast %140 : vector<56xf32> to vector<1x56xf32>
    %142 = tpu.concatenate %137, %141 in 0 : vector<1x56xf32>, vector<1x56xf32> -> vector<2x56xf32>
    %143 = tpu.iota {dimensions = array<i32: 1>} : vector<1x56xi32>
    %cst_56 = arith.constant 0.000000e+00 : f32
    %144 = vector.broadcast %cst_56 : f32 to vector<2x56xf32>
    %c3_i32_57 = arith.constant 3 : i32
    %145 = vector.broadcast %c3_i32_57 : i32 to vector<1x56xi32>
    %146 = arith.andi %143, %145 : vector<1x56xi32>
    %c0_i32_58 = arith.constant 0 : i32
    %147 = vector.broadcast %c0_i32_58 : i32 to vector<1x56xi32>
    %148 = arith.cmpi eq, %146, %147 : vector<1x56xi32>
    %149 = arith.extui %148 : vector<1x56xi1> to vector<1x56xi32>
    %150 = arith.sitofp %149 : vector<1x56xi32> to vector<1x56xf32>
    %151 = vector.broadcast %150 : vector<1x56xf32> to vector<2x56xf32>
    %152 = arith.mulf %142, %151 : vector<2x56xf32>
    %cst_59 = arith.constant dense<0.000000e+00> : vector<2xf32>
    %153 = vector.multi_reduction <add>, %152, %cst_59 [1] : vector<2x56xf32> to vector<2xf32>
    %154 = vector.shape_cast %153 : vector<2xf32> to vector<2x1xf32>
    %155 = vector.broadcast %154 : vector<2x1xf32> to vector<2x56xf32>
    %156 = vector.broadcast %150 : vector<1x56xf32> to vector<2x56xf32>
    %157 = arith.mulf %155, %156 : vector<2x56xf32>
    %158 = arith.addf %144, %157 : vector<2x56xf32>
    %c3_i32_60 = arith.constant 3 : i32
    %159 = vector.broadcast %c3_i32_60 : i32 to vector<1x56xi32>
    %160 = arith.andi %143, %159 : vector<1x56xi32>
    %c1_i32_61 = arith.constant 1 : i32
    %161 = vector.broadcast %c1_i32_61 : i32 to vector<1x56xi32>
    %162 = arith.cmpi eq, %160, %161 : vector<1x56xi32>
    %163 = arith.extui %162 : vector<1x56xi1> to vector<1x56xi32>
    %164 = arith.sitofp %163 : vector<1x56xi32> to vector<1x56xf32>
    %165 = vector.broadcast %164 : vector<1x56xf32> to vector<2x56xf32>
    %166 = arith.mulf %142, %165 : vector<2x56xf32>
    %cst_62 = arith.constant dense<0.000000e+00> : vector<2xf32>
    %167 = vector.multi_reduction <add>, %166, %cst_62 [1] : vector<2x56xf32> to vector<2xf32>
    %168 = vector.shape_cast %167 : vector<2xf32> to vector<2x1xf32>
    %169 = vector.broadcast %168 : vector<2x1xf32> to vector<2x56xf32>
    %170 = vector.broadcast %164 : vector<1x56xf32> to vector<2x56xf32>
    %171 = arith.mulf %169, %170 : vector<2x56xf32>
    %172 = arith.addf %158, %171 : vector<2x56xf32>
    %c3_i32_63 = arith.constant 3 : i32
    %173 = vector.broadcast %c3_i32_63 : i32 to vector<1x56xi32>
    %174 = arith.andi %143, %173 : vector<1x56xi32>
    %c2_i32_64 = arith.constant 2 : i32
    %175 = vector.broadcast %c2_i32_64 : i32 to vector<1x56xi32>
    %176 = arith.cmpi eq, %174, %175 : vector<1x56xi32>
    %177 = arith.extui %176 : vector<1x56xi1> to vector<1x56xi32>
    %178 = arith.sitofp %177 : vector<1x56xi32> to vector<1x56xf32>
    %179 = vector.broadcast %178 : vector<1x56xf32> to vector<2x56xf32>
    %180 = arith.mulf %142, %179 : vector<2x56xf32>
    %cst_65 = arith.constant dense<0.000000e+00> : vector<2xf32>
    %181 = vector.multi_reduction <add>, %180, %cst_65 [1] : vector<2x56xf32> to vector<2xf32>
    %182 = vector.shape_cast %181 : vector<2xf32> to vector<2x1xf32>
    %183 = vector.broadcast %182 : vector<2x1xf32> to vector<2x56xf32>
    %184 = vector.broadcast %178 : vector<1x56xf32> to vector<2x56xf32>
    %185 = arith.mulf %183, %184 : vector<2x56xf32>
    %186 = arith.addf %172, %185 : vector<2x56xf32>
    %c3_i32_66 = arith.constant 3 : i32
    %187 = vector.broadcast %c3_i32_66 : i32 to vector<1x56xi32>
    %188 = arith.andi %143, %187 : vector<1x56xi32>
    %c3_i32_67 = arith.constant 3 : i32
    %189 = vector.broadcast %c3_i32_67 : i32 to vector<1x56xi32>
    %190 = arith.cmpi eq, %188, %189 : vector<1x56xi32>
    %191 = arith.extui %190 : vector<1x56xi1> to vector<1x56xi32>
    %192 = arith.sitofp %191 : vector<1x56xi32> to vector<1x56xf32>
    %193 = vector.broadcast %192 : vector<1x56xf32> to vector<2x56xf32>
    %194 = arith.mulf %142, %193 : vector<2x56xf32>
    %cst_68 = arith.constant dense<0.000000e+00> : vector<2xf32>
    %195 = vector.multi_reduction <add>, %194, %cst_68 [1] : vector<2x56xf32> to vector<2xf32>
    %196 = vector.shape_cast %195 : vector<2xf32> to vector<2x1xf32>
    %197 = vector.broadcast %196 : vector<2x1xf32> to vector<2x56xf32>
    %198 = vector.broadcast %192 : vector<1x56xf32> to vector<2x56xf32>
    %199 = arith.mulf %197, %198 : vector<2x56xf32>
    %200 = arith.addf %186, %199 : vector<2x56xf32>
    %cst_69 = arith.constant 0.00255102036 : f32
    %201 = vector.broadcast %cst_69 : f32 to vector<2x56xf32>
    %202 = arith.mulf %200, %201 : vector<2x56xf32>
    %203 = vector.extract_strided_slice %202 {offsets = [0, 0], sizes = [1, 56], strides = [1, 1]} : vector<2x56xf32> to vector<1x56xf32>
    %204 = vector.extract_strided_slice %202 {offsets = [1, 0], sizes = [1, 56], strides = [1, 1]} : vector<2x56xf32> to vector<1x56xf32>
    %205 = arith.mulf %203, %203 : vector<1x56xf32>
    %206 = arith.subf %204, %205 : vector<1x56xf32>
    %207 = vector.extract_strided_slice %133 {offsets = [0, 0], sizes = [1, 56], strides = [1, 1]} : vector<3x64xf32> to vector<1x56xf32>
    %cst_70 = arith.constant 9.99999974E-6 : f32
    %208 = vector.broadcast %cst_70 : f32 to vector<1x56xf32>
    %209 = arith.addf %206, %208 : vector<1x56xf32>
    %210 = math.rsqrt %209 : vector<1x56xf32>
    %211 = arith.mulf %207, %210 : vector<1x56xf32>
    %212 = vector.extract_strided_slice %133 {offsets = [1, 0], sizes = [1, 56], strides = [1, 1]} : vector<3x64xf32> to vector<1x56xf32>
    %213 = arith.mulf %203, %211 : vector<1x56xf32>
    %214 = arith.subf %212, %213 : vector<1x56xf32>
    %215 = vector.extract_strided_slice %133 {offsets = [2, 0], sizes = [1, 48], strides = [1, 1]} : vector<3x64xf32> to vector<1x48xf32>
    %c0_71 = arith.constant 0 : index
    %c0_72 = arith.constant 0 : index
    %c0_73 = arith.constant 0 : index
    %216 = vector.load %arg2[%c0_71, %c0_72, %c0_73] : memref<3x56x48xf32, #tpu.memory_space<vmem>>, vector<1x56x48xf32>
    %217 = vector.shape_cast %216 : vector<1x56x48xf32> to vector<56x48xf32>
    %c1_74 = arith.constant 1 : index
    %c0_75 = arith.constant 0 : index
    %c0_76 = arith.constant 0 : index
    %218 = vector.load %arg2[%c1_74, %c0_75, %c0_76] : memref<3x56x48xf32, #tpu.memory_space<vmem>>, vector<1x56x48xf32>
    %219 = vector.shape_cast %218 : vector<1x56x48xf32> to vector<56x48xf32>
    %c2_77 = arith.constant 2 : index
    %c0_78 = arith.constant 0 : index
    %c0_79 = arith.constant 0 : index
    %220 = vector.load %arg2[%c2_77, %c0_78, %c0_79] : memref<3x56x48xf32, #tpu.memory_space<vmem>>, vector<1x56x48xf32>
    %221 = vector.shape_cast %220 : vector<1x56x48xf32> to vector<56x48xf32>
    %c0_80 = arith.constant 0 : index
    %c0_81 = arith.constant 0 : index
    %c0_82 = arith.constant 0 : index
    %222 = vector.load %arg5[%c0_80, %c0_81, %c0_82] : memref<2x14x56xf32, #tpu.memory_space<vmem>>, vector<1x14x56xf32>
    %223 = vector.shape_cast %222 : vector<1x14x56xf32> to vector<14x56xf32>
    %224 = vector.broadcast %211 : vector<1x56xf32> to vector<14x56xf32>
    %225 = arith.mulf %223, %224 : vector<14x56xf32>
    %226 = vector.broadcast %214 : vector<1x56xf32> to vector<14x56xf32>
    %227 = arith.addf %225, %226 : vector<14x56xf32>
    %228 = vector.extract_strided_slice %227 {offsets = [0, 0], sizes = [12, 56], strides = [1, 1]} : vector<14x56xf32> to vector<12x56xf32>
    %cst_83 = arith.constant dense<0.000000e+00> : vector<12x48xf32>
    %229 = tpu.matmul %228, %217, %cst_83 {dimension_numbers = #tpu.dot_dimension_numbers<[1], [0], [0], [1], [0, 0, 1, 1], [], []>} : vector<12x56xf32>, vector<56x48xf32>, vector<12x48xf32> -> vector<12x48xf32>
    %230 = vector.extract_strided_slice %227 {offsets = [1, 0], sizes = [12, 56], strides = [1, 1]} : vector<14x56xf32> to vector<12x56xf32>
    %cst_84 = arith.constant dense<0.000000e+00> : vector<12x48xf32>
    %231 = tpu.matmul %230, %219, %cst_84 {dimension_numbers = #tpu.dot_dimension_numbers<[1], [0], [0], [1], [0, 0, 1, 1], [], []>} : vector<12x56xf32>, vector<56x48xf32>, vector<12x48xf32> -> vector<12x48xf32>
    %232 = arith.addf %229, %231 : vector<12x48xf32>
    %233 = vector.extract_strided_slice %227 {offsets = [2, 0], sizes = [12, 56], strides = [1, 1]} : vector<14x56xf32> to vector<12x56xf32>
    %cst_85 = arith.constant dense<0.000000e+00> : vector<12x48xf32>
    %234 = tpu.matmul %233, %221, %cst_85 {dimension_numbers = #tpu.dot_dimension_numbers<[1], [0], [0], [1], [0, 0, 1, 1], [], []>} : vector<12x56xf32>, vector<56x48xf32>, vector<12x48xf32> -> vector<12x48xf32>
    %235 = arith.addf %232, %234 : vector<12x48xf32>
    %236 = vector.broadcast %215 : vector<1x48xf32> to vector<12x48xf32>
    %237 = arith.addf %235, %236 : vector<12x48xf32>
    %cst_86 = arith.constant 0.000000e+00 : f32
    %238 = vector.broadcast %cst_86 : f32 to vector<12x48xf32>
    %239 = arith.maximumf %237, %238 : vector<12x48xf32>
    %c0_87 = arith.constant 0 : index
    %c0_88 = arith.constant 0 : index
    %c0_89 = arith.constant 0 : index
    %240 = vector.load %arg4[%c0_87, %c0_88, %c0_89] : memref<2x12x48xf32, #tpu.memory_space<vmem>>, vector<1x12x48xf32>
    %241 = vector.shape_cast %240 : vector<1x12x48xf32> to vector<12x48xf32>
    %242 = vector.shape_cast %239 : vector<12x48xf32> to vector<1x12x48xf32>
    tpu.vector_store %arg4[%c0_87, %c0_88, %c0_89], %242 {strides = array<i32>} : memref<2x12x48xf32, #tpu.memory_space<vmem>>, vector<1x12x48xf32>,
    %c1_90 = arith.constant 1 : index
    %c0_91 = arith.constant 0 : index
    %c0_92 = arith.constant 0 : index
    %243 = vector.load %arg5[%c1_90, %c0_91, %c0_92] : memref<2x14x56xf32, #tpu.memory_space<vmem>>, vector<1x14x56xf32>
    %244 = vector.shape_cast %243 : vector<1x14x56xf32> to vector<14x56xf32>
    %245 = vector.broadcast %211 : vector<1x56xf32> to vector<14x56xf32>
    %246 = arith.mulf %244, %245 : vector<14x56xf32>
    %247 = vector.broadcast %214 : vector<1x56xf32> to vector<14x56xf32>
    %248 = arith.addf %246, %247 : vector<14x56xf32>
    %249 = vector.extract_strided_slice %248 {offsets = [0, 0], sizes = [12, 56], strides = [1, 1]} : vector<14x56xf32> to vector<12x56xf32>
    %cst_93 = arith.constant dense<0.000000e+00> : vector<12x48xf32>
    %250 = tpu.matmul %249, %217, %cst_93 {dimension_numbers = #tpu.dot_dimension_numbers<[1], [0], [0], [1], [0, 0, 1, 1], [], []>} : vector<12x56xf32>, vector<56x48xf32>, vector<12x48xf32> -> vector<12x48xf32>
    %251 = vector.extract_strided_slice %248 {offsets = [1, 0], sizes = [12, 56], strides = [1, 1]} : vector<14x56xf32> to vector<12x56xf32>
    %cst_94 = arith.constant dense<0.000000e+00> : vector<12x48xf32>
    %252 = tpu.matmul %251, %219, %cst_94 {dimension_numbers = #tpu.dot_dimension_numbers<[1], [0], [0], [1], [0, 0, 1, 1], [], []>} : vector<12x56xf32>, vector<56x48xf32>, vector<12x48xf32> -> vector<12x48xf32>
    %253 = arith.addf %250, %252 : vector<12x48xf32>
    %254 = vector.extract_strided_slice %248 {offsets = [2, 0], sizes = [12, 56], strides = [1, 1]} : vector<14x56xf32> to vector<12x56xf32>
    %cst_95 = arith.constant dense<0.000000e+00> : vector<12x48xf32>
    %255 = tpu.matmul %254, %221, %cst_95 {dimension_numbers = #tpu.dot_dimension_numbers<[1], [0], [0], [1], [0, 0, 1, 1], [], []>} : vector<12x56xf32>, vector<56x48xf32>, vector<12x48xf32> -> vector<12x48xf32>
    %256 = arith.addf %253, %255 : vector<12x48xf32>
    %257 = vector.broadcast %215 : vector<1x48xf32> to vector<12x48xf32>
    %258 = arith.addf %256, %257 : vector<12x48xf32>
    %cst_96 = arith.constant 0.000000e+00 : f32
    %259 = vector.broadcast %cst_96 : f32 to vector<12x48xf32>
    %260 = arith.maximumf %258, %259 : vector<12x48xf32>
    %c1_97 = arith.constant 1 : index
    %c0_98 = arith.constant 0 : index
    %c0_99 = arith.constant 0 : index
    %261 = vector.load %arg4[%c1_97, %c0_98, %c0_99] : memref<2x12x48xf32, #tpu.memory_space<vmem>>, vector<1x12x48xf32>
    %262 = vector.shape_cast %261 : vector<1x12x48xf32> to vector<12x48xf32>
    %263 = vector.shape_cast %260 : vector<12x48xf32> to vector<1x12x48xf32>
    tpu.vector_store %arg4[%c1_97, %c0_98, %c0_99], %263 {strides = array<i32>} : memref<2x12x48xf32, #tpu.memory_space<vmem>>, vector<1x12x48xf32>,
    return
  }
}

</mosaic_0001>

<llo_original>
// kernel: tile.58
$region0: #{tile.58}
  #allocation0 [shape = 's32[1]{0}', space=sflag, size = 0x4, scoped, tag = 'scoped memory for tile.58']
  %s0 = inlined_call_operand.vmem [shape: f32[4], index: 0, kind: input, shape index: {}]
  %s1 = inlined_call_operand.vmem [shape: f32[12,4], index: 1, kind: output, shape index: {}]
  // Predicated region
  $region2: #{tile.58} parent=0 // pred_check
    _
  $region3: #{tile.58} parent=0 // pred_check_branch
    %3 = sbr.rel (0) target = $region5
  $region4: #{tile.58} parent=0 // pred_region
    _
  $region5: #{tile.58} parent=0 // pred_fallthru
    _
  %v4 = vld [vmem:[%s0] ss:$0 sm:$0xff]
  %5 = vst [vmem:[%s1] sm:$0xff] %v4
  %s6 = scalar_lea.vmem %s1, 8
  %7 = vst [vmem:[%s6] sm:$0xff] %v4

// kernel: tile.59
$region0: #{tile.59}
  %s0 = inlined_call_operand.vmem [shape: f32[12,4], index: 0, kind: input, shape index: {}]
  %s1 = inlined_call_operand.vmem [shape: f32[48], index: 1, kind: output, shape index: {}]
  $region1: #{tile.59} parent=0
    #allocation0 [shape = 'u8[4096]{0}', space=vmem, size = 0x1000, scoped, tag = 'scoped mem for output reshape']
    %v2 = vld [vmem:[%s0] sm:$0x1]
    %vm3 = vcmask 31744
    %4 = vst.msk [vmem:[#allocation0] sm:$0x1] %vm3, %v2
    %s5 = scalar_lea.vmem %s0, 11
    %v6 = vld [vmem:[%s5] sm:$0x1]
    %7 = vrot.lane.b32.xlu0 %v6, 44
    %v8 = vpop.permute.xlu0 %7
    %vm9 = vcmask 392544
    %10 = vst.msk [vmem:[#allocation0] sm:$0x1] %vm9, %v8
    %s11 = scalar_lea.vmem %s0, 10
    %v12 = vld [vmem:[%s11] sm:$0x1]
    %13 = vrot.lane.b32.xlu0 %v12, 40
    %v14 = vpop.permute.xlu0 %13
    %vm15 = vcmask 359744
    %16 = vst.msk [vmem:[#allocation0] sm:$0x1] %vm15, %v14
    %s17 = scalar_lea.vmem %s0, 9
    %v18 = vld [vmem:[%s17] sm:$0x1]
    %19 = vrot.lane.b32.xlu0 %v18, 36
    %v20 = vpop.permute.xlu0 %19
    %vm21 = vcmask 326944
    %22 = vst.msk [vmem:[#allocation0] sm:$0x1] %vm21, %v20
    %s23 = scalar_lea.vmem %s0, 8
    %v24 = vld [vmem:[%s23] sm:$0x1]
    %25 = vrot.lane.b32.xlu0 %v24, 32
    %v26 = vpop.permute.xlu0 %25
    %vm27 = vcmask 294144
    %28 = vst.msk [vmem:[#allocation0] sm:$0x1] %vm27, %v26
    %s29 = scalar_lea.vmem %s0, 7
    %v30 = vld [vmem:[%s29] sm:$0x1]
    %31 = vrot.lane.b32.xlu0 %v30, 28
    %v32 = vpop.permute.xlu0 %31
    %vm33 = vcmask 261344
    %34 = vst.msk [vmem:[#allocation0] sm:$0x1] %vm33, %v32
    %s35 = scalar_lea.vmem %s0, 6
    %v36 = vld [vmem:[%s35] sm:$0x1]
    %37 = vrot.lane.b32.xlu0 %v36, 24
    %v38 = vpop.permute.xlu0 %37
    %vm39 = vcmask 228544
    %40 = vst.msk [vmem:[#allocation0] sm:$0x1] %vm39, %v38
    %s41 = scalar_lea.vmem %s0, 5
    %v42 = vld [vmem:[%s41] sm:$0x1]
    %43 = vrot.lane.b32.xlu0 %v42, 20
    %v44 = vpop.permute.xlu0 %43
    %vm45 = vcmask 195744
    %46 = vst.msk [vmem:[#allocation0] sm:$0x1] %vm45, %v44
    %s47 = scalar_lea.vmem %s0, 4
    %v48 = vld [vmem:[%s47] sm:$0x1]
    %49 = vrot.lane.b32.xlu0 %v48, 16
    %v50 = vpop.permute.xlu0 %49
    %vm51 = vcmask 162944
    %52 = vst.msk [vmem:[#allocation0] sm:$0x1] %vm51, %v50
    %s53 = scalar_lea.vmem %s0, 3
    %v54 = vld [vmem:[%s53] sm:$0x1]
    %55 = vrot.lane.b32.xlu0 %v54, 12
    %v56 = vpop.permute.xlu0 %55
    %vm57 = vcmask 130144
    %58 = vst.msk [vmem:[#allocation0] sm:$0x1] %vm57, %v56
    %s59 = scalar_lea.vmem %s0, 2
    %v60 = vld [vmem:[%s59] sm:$0x1]
    %61 = vrot.lane.b32.xlu0 %v60, 8
    %v62 = vpop.permute.xlu0 %61
    %vm63 = vcmask 97344
    %64 = vst.msk [vmem:[#allocation0] sm:$0x1] %vm63, %v62
    %s65 = scalar_lea.vmem %s0, 1
    %v66 = vld [vmem:[%s65] sm:$0x1]
    %67 = vrot.lane.b32.xlu0 %v66, 4
    %v68 = vpop.permute.xlu0 %67
    %vm69 = vcmask 64544
    %70 = vst.msk [vmem:[#allocation0] sm:$0x1] %vm69, %v68
    %s72 = sshll.u32 1, 1
    %s73 = ssub.s32 %s72, 1
    %v75 = vld [vmem:[#allocation0] sm:%s73]
    %s76 = sshll.u32 1, 1
    %s77 = ssub.s32 %s76, 1
    %78 = vst [vmem:[%s1] sm:%s77] %v75

// kernel: tile.53
$region0: #{tile.53}
  #allocation0 [shape = 's32[1]{0}', space=sflag, size = 0x4, scoped, tag = 'scoped memory for tile.53']
  %s0 = inlined_call_operand.vmem [shape: f32[4], index: 0, kind: input, shape index: {}]
  %s1 = inlined_call_operand.vmem [shape: f32[14,4], index: 1, kind: output, shape index: {}]
  // Predicated region
  $region2: #{tile.53} parent=0 // pred_check
    _
  $region3: #{tile.53} parent=0 // pred_check_branch
    %3 = sbr.rel (0) target = $region5
  $region4: #{tile.53} parent=0 // pred_region
    _
  $region5: #{tile.53} parent=0 // pred_fallthru
    _
  %v4 = vld [vmem:[%s0] ss:$0 sm:$0xff]
  %5 = vst [vmem:[%s1] sm:$0xff] %v4
  %s6 = scalar_lea.vmem %s1, 8
  %7 = vst [vmem:[%s6] sm:$0xff] %v4

// kernel: tile.54
$region0: #{tile.54}
  %s0 = inlined_call_operand.vmem [shape: f32[14,4], index: 0, kind: input, shape index: {}]
  %s1 = inlined_call_operand.vmem [shape: f32[56], index: 1, kind: output, shape index: {}]
  $region1: #{tile.54} parent=0
    #allocation0 [shape = 'u8[4096]{0}', space=vmem, size = 0x1000, scoped, tag = 'scoped mem for output reshape']
    %v2 = vld [vmem:[%s0] sm:$0x1]
    %vm3 = vcmask 31744
    %4 = vst.msk [vmem:[#allocation0] sm:$0x1] %vm3, %v2
    %s5 = scalar_lea.vmem %s0, 13
    %v6 = vld [vmem:[%s5] sm:$0x1]
    %7 = vrot.lane.b32.xlu0 %v6, 52
    %v8 = vpop.permute.xlu0 %7
    %vm9 = vcmask 458144
    %10 = vst.msk [vmem:[#allocation0] sm:$0x1] %vm9, %v8
    %s11 = scalar_lea.vmem %s0, 12
    %v12 = vld [vmem:[%s11] sm:$0x1]
    %13 = vrot.lane.b32.xlu0 %v12, 48
    %v14 = vpop.permute.xlu0 %13
    %vm15 = vcmask 425344
    %16 = vst.msk [vmem:[#allocation0] sm:$0x1] %vm15, %v14
    %s17 = scalar_lea.vmem %s0, 11
    %v18 = vld [vmem:[%s17] sm:$0x1]
    %19 = vrot.lane.b32.xlu0 %v18, 44
    %v20 = vpop.permute.xlu0 %19
    %vm21 = vcmask 392544
    %22 = vst.msk [vmem:[#allocation0] sm:$0x1] %vm21, %v20
    %s23 = scalar_lea.vmem %s0, 10
    %v24 = vld [vmem:[%s23] sm:$0x1]
    %25 = vrot.lane.b32.xlu0 %v24, 40
    %v26 = vpop.permute.xlu0 %25
    %vm27 = vcmask 359744
    %28 = vst.msk [vmem:[#allocation0] sm:$0x1] %vm27, %v26
    %s29 = scalar_lea.vmem %s0, 9
    %v30 = vld [vmem:[%s29] sm:$0x1]
    %31 = vrot.lane.b32.xlu0 %v30, 36
    %v32 = vpop.permute.xlu0 %31
    %vm33 = vcmask 326944
    %34 = vst.msk [vmem:[#allocation0] sm:$0x1] %vm33, %v32
    %s35 = scalar_lea.vmem %s0, 8
    %v36 = vld [vmem:[%s35] sm:$0x1]
    %37 = vrot.lane.b32.xlu0 %v36, 32
    %v38 = vpop.permute.xlu0 %37
    %vm39 = vcmask 294144
    %40 = vst.msk [vmem:[#allocation0] sm:$0x1] %vm39, %v38
    %s41 = scalar_lea.vmem %s0, 7
    %v42 = vld [vmem:[%s41] sm:$0x1]
    %43 = vrot.lane.b32.xlu0 %v42, 28
    %v44 = vpop.permute.xlu0 %43
    %vm45 = vcmask 261344
    %46 = vst.msk [vmem:[#allocation0] sm:$0x1] %vm45, %v44
    %s47 = scalar_lea.vmem %s0, 6
    %v48 = vld [vmem:[%s47] sm:$0x1]
    %49 = vrot.lane.b32.xlu0 %v48, 24
    %v50 = vpop.permute.xlu0 %49
    %vm51 = vcmask 228544
    %52 = vst.msk [vmem:[#allocation0] sm:$0x1] %vm51, %v50
    %s53 = scalar_lea.vmem %s0, 5
    %v54 = vld [vmem:[%s53] sm:$0x1]
    %55 = vrot.lane.b32.xlu0 %v54, 20
    %v56 = vpop.permute.xlu0 %55
    %vm57 = vcmask 195744
    %58 = vst.msk [vmem:[#allocation0] sm:$0x1] %vm57, %v56
    %s59 = scalar_lea.vmem %s0, 4
    %v60 = vld [vmem:[%s59] sm:$0x1]
    %61 = vrot.lane.b32.xlu0 %v60, 16
    %v62 = vpop.permute.xlu0 %61
    %vm63 = vcmask 162944
    %64 = vst.msk [vmem:[#allocation0] sm:$0x1] %vm63, %v62
    %s65 = scalar_lea.vmem %s0, 3
    %v66 = vld [vmem:[%s65] sm:$0x1]
    %67 = vrot.lane.b32.xlu0 %v66, 12
    %v68 = vpop.permute.xlu0 %67
    %vm69 = vcmask 130144
    %70 = vst.msk [vmem:[#allocation0] sm:$0x1] %vm69, %v68
    %s71 = scalar_lea.vmem %s0, 2
    %v72 = vld [vmem:[%s71] sm:$0x1]
    %73 = vrot.lane.b32.xlu0 %v72, 8
    %v74 = vpop.permute.xlu0 %73
    %vm75 = vcmask 97344
    %76 = vst.msk [vmem:[#allocation0] sm:$0x1] %vm75, %v74
    %s77 = scalar_lea.vmem %s0, 1
    %v78 = vld [vmem:[%s77] sm:$0x1]
    %79 = vrot.lane.b32.xlu0 %v78, 4
    %v80 = vpop.permute.xlu0 %79
    %vm81 = vcmask 64544
    %82 = vst.msk [vmem:[#allocation0] sm:$0x1] %vm81, %v80
    %s84 = sshll.u32 1, 1
    %s85 = ssub.s32 %s84, 1
    %v87 = vld [vmem:[#allocation0] sm:%s85]
    %s88 = sshll.u32 1, 1
    %s89 = ssub.s32 %s88, 1
    %90 = vst [vmem:[%s1] sm:%s89] %v87

// kernel: tile.38
$region0: #{tile.38}
  #allocation0 [shape = 's32[1]{0}', space=sflag, size = 0x4, scoped, tag = 'scoped memory for tile.38']
  %s0 = inlined_call_operand.vmem [shape: f32[4], index: 0, kind: input, shape index: {}]
  %s1 = inlined_call_operand.vmem [shape: f32[16,4], index: 1, kind: output, shape index: {}]
  // Predicated region
  $region2: #{tile.38} parent=0 // pred_check
    _
  $region3: #{tile.38} parent=0 // pred_check_branch
    %3 = sbr.rel (0) target = $region5
  $region4: #{tile.38} parent=0 // pred_region
    _
  $region5: #{tile.38} parent=0 // pred_fallthru
    _
  %v4 = vld [vmem:[%s0] ss:$0 sm:$0xff]
  %5 = vst [vmem:[%s1] sm:$0xff] %v4
  %s6 = scalar_lea.vmem %s1, 8
  %7 = vst [vmem:[%s6] sm:$0xff] %v4

// kernel: dense_block_forward.1
$region0: #{dense_block_forward.1}
  #allocation0 [shape = 'u32[]', space=smem, size = 0x4, offset = 0x4, fixed_abs, tag = 'smem constant byte address 0x4 - core index']
  #allocation1 [shape = 'u32[144,128]{1,0:T(1,128)}', space=vmem, size = 0x12000, scoped, tag = 'internal scratch']
  #allocation2 [shape = 'f32[2,14,56]{2,1,0:T(8,128)}', space=vmem, size = 0x4000, scoped, tag = 'scratch operand']
  %s0 = inlined_call_operand.vmem [shape: f32[2,16,64], index: 0, kind: input, shape index: {}]
  %s1 = inlined_call_operand.vmem [shape: f32[3,64,56], index: 1, kind: input, shape index: {}]
  %s2 = inlined_call_operand.vmem [shape: f32[3,56,48], index: 2, kind: input, shape index: {}]
  %s3 = inlined_call_operand.vmem [shape: f32[2,3,64], index: 3, kind: input, shape index: {}]
  %s4 = inlined_call_operand.vmem [shape: f32[2,12,48], index: 4, kind: output, shape index: {}]
  %s5 = sld [smem:[#allocation0]]
  $region26: #{dense_block_forward.1} parent=0
    _
  %s7 = ssub.s32 1, %s5
  %s8 = scalar_select 0, %s7, %s5
  // Predicated region
  $region2: #{dense_block_forward.1} parent=0 // pred_check
    _
  $region3: #{dense_block_forward.1} parent=0 // pred_check_branch
    %10 = sbr.rel (0) target = $region5
  $region4: #{dense_block_forward.1} parent=0 // pred_region
    _
  $region5: #{dense_block_forward.1} parent=0 // pred_fallthru
    _
  // Predicated region
  $region6: #{dense_block_forward.1} parent=0 // pred_check
    _
  $region7: #{dense_block_forward.1} parent=0 // pred_check_branch
    %12 = sbr.rel (0) target = $region9
  $region8: #{dense_block_forward.1} parent=0 // pred_region
    _
  $region9: #{dense_block_forward.1} parent=0 // pred_fallthru
    _
  // Predicated region
  $region10: #{dense_block_forward.1} parent=0 // pred_check
    _
  $region11: #{dense_block_forward.1} parent=0 // pred_check_branch
    %14 = sbr.rel (0) target = $region13
  $region12: #{dense_block_forward.1} parent=0 // pred_region
    _
  $region13: #{dense_block_forward.1} parent=0 // pred_fallthru
    _
  // Predicated region
  $region14: #{dense_block_forward.1} parent=0 // pred_check
    _
  $region15: #{dense_block_forward.1} parent=0 // pred_check_branch
    %16 = sbr.rel (0) target = $region17
  $region16: #{dense_block_forward.1} parent=0 // pred_region
    _
  $region17: #{dense_block_forward.1} parent=0 // pred_fallthru
    _
  %v17 = vld [vmem:[%s3] sm:$0x7]
  %v18 = vld [vmem:[%s0] sm:$0xff]
  %v19 = vld [vmem:[%s0 + $0x8] sm:$0xff]
  %v20 = vld [vmem:[%s0 + $0x10] sm:$0xff]
  %v21 = vld [vmem:[%s0 + $0x18] sm:$0xff]
  %vm22 = vcmask 523264
  %v23 = vsel %vm22, %v18, 0.0
  %v24 = vsel %vm22, %v20, 0.0
  %v25 = vadd.f32 %v23, %v24
  %v26 = vsel %vm22, %v19, 0.0
  %v27 = vsel %vm22, %v21, 0.0
  %v28 = vadd.f32 %v26, %v27
  %v29 = vsel %vm22, %v25, 0.0
  %v30 = vsel %vm22, %v28, 0.0
  %v31 = vadd.f32 %v29, %v30
  %v32 = vrot.slane %v31, 4
  %v33 = vadd.f32 %v31, %v32
  %v34 = vrot.slane %v33, 2
  %v35 = vadd.f32 %v33, %v34
  %v36 = vrot.slane %v35, 1
  %v37 = vadd.f32 %v35, %v36
  %v38 = vmul.f32 %v18, %v18
  %v39 = vmul.f32 %v19, %v19
  %v40 = vmul.f32 %v20, %v20
  %v41 = vmul.f32 %v21, %v21
  %v42 = vsel %vm22, %v38, 0.0
  %v43 = vsel %vm22, %v40, 0.0
  %v44 = vadd.f32 %v42, %v43
  %v45 = vsel %vm22, %v39, 0.0
  %v46 = vsel %vm22, %v41, 0.0
  %v47 = vadd.f32 %v45, %v46
  %v48 = vsel %vm22, %v44, 0.0
  %v49 = vsel %vm22, %v47, 0.0
  %v50 = vadd.f32 %v48, %v49
  %v51 = vrot.slane %v50, 4
  %v52 = vadd.f32 %v50, %v51
  %v53 = vrot.slane %v52, 2
  %v54 = vadd.f32 %v52, %v53
  %v55 = vrot.slane %v54, 1
  %v56 = vadd.f32 %v54, %v55
  %vm57 = vcmask 1040384
  %v58 = vsel %vm57, %v37, %v56
  %v59 = vlaneseq
  %v60 = vand.u32 %v59, 127
  %v61 = vand.u32 %v60, 3
  %vm62 = vcmp.eq.s32.totalorder %v61, 0
  %v63 = vsel %vm62, 1, 0
  %v64 = vcvt.s32.f32 %v63
  %v65 = vmul.f32 %v58, %v64
  %vm66 = vcmask 517120
  %v67 = vsel %vm66, %v65, 0.0
  %68 = vadd.xlane.f32.xlu0 %v67
  %v69 = vpop.xlane.xlu0 %68
  %v70 = vmul.f32 %v69, %v64
  %v71 = vadd.f32 %v70, 0.0
  %vm72 = vcmp.eq.s32.totalorder %v61, 1
  %v73 = vsel %vm72, 1, 0
  %v74 = vcvt.s32.f32 %v73
  %v75 = vmul.f32 %v58, %v74
  %v76 = vsel %vm66, %v75, 0.0
  %77 = vadd.xlane.f32.xlu0 %v76
  %v78 = vpop.xlane.xlu0 %77
  %v79 = vmul.f32 %v78, %v74
  %v80 = vadd.f32 %v71, %v79
  %vm81 = vcmp.eq.s32.totalorder %v61, 2
  %v82 = vsel %vm81, 1, 0
  %v83 = vcvt.s32.f32 %v82
  %v84 = vmul.f32 %v58, %v83
  %v85 = vsel %vm66, %v84, 0.0
  %86 = vadd.xlane.f32.xlu0 %v85
  %v87 = vpop.xlane.xlu0 %86
  %v88 = vmul.f32 %v87, %v83
  %v89 = vadd.f32 %v80, %v88
  %vm90 = vcmp.eq.s32.totalorder %v61, 3
  %v91 = vsel %vm90, 1, 0
  %v92 = vcvt.s32.f32 %v91
  %v93 = vmul.f32 %v58, %v92
  %v94 = vsel %vm66, %v93, 0.0
  %95 = vadd.xlane.f32.xlu0 %v94
  %v96 = vpop.xlane.xlu0 %95
  %v97 = vmul.f32 %v96, %v92
  %v98 = vadd.f32 %v89, %v97
  %v99 = vmul.f32 %v98, 0.001953125
  %v100 = vmul.f32 %v99, %v99
  %v102 = vrot.slane %v100, 7
  %v104 = vsub.f32 %v99, %v102
  %v105 = vadd.f32 %v104, 1e-05
  %v106 = vrsqrt.pop %v105
  %v108 = vrot.slane %v106, 1
  %v110 = vmul.f32 %v17, %v108
  %v111 = vmul.f32 %v99, %v110
  %v113 = vrot.slane %v111, 7
  %v115 = vsub.f32 %v17, %v113
  %v116 = vld [vmem:[%s1] sm:$0xff]
  %v117 = vld [vmem:[%s1 + $0x8] sm:$0xff]
  %v118 = vld [vmem:[%s1 + $0x10] sm:$0xff]
  %v119 = vld [vmem:[%s1 + $0x18] sm:$0xff]
  %v120 = vld [vmem:[%s1 + $0x20] sm:$0xff]
  %v121 = vld [vmem:[%s1 + $0x28] sm:$0xff]
  %v122 = vld [vmem:[%s1 + $0x30] sm:$0xff]
  %v123 = vld [vmem:[%s1 + $0x38] sm:$0xff]
  %s124 = scalar_lea.vmem %s1, 64
  %v125 = vld [vmem:[%s124] sm:$0xff]
  %v126 = vld [vmem:[%s124 + $0x8] sm:$0xff]
  %v127 = vld [vmem:[%s124 + $0x10] sm:$0xff]
  %v128 = vld [vmem:[%s124 + $0x18] sm:$0xff]
  %v129 = vld [vmem:[%s124 + $0x20] sm:$0xff]
  %v130 = vld [vmem:[%s124 + $0x28] sm:$0xff]
  %v131 = vld [vmem:[%s124 + $0x30] sm:$0xff]
  %v132 = vld [vmem:[%s124 + $0x38] sm:$0xff]
  %s133 = scalar_lea.vmem %s1, 128
  %v134 = vld [vmem:[%s133] sm:$0xff]
  %v135 = vld [vmem:[%s133 + $0x8] sm:$0xff]
  %v136 = vld [vmem:[%s133 + $0x10] sm:$0xff]
  %v137 = vld [vmem:[%s133 + $0x18] sm:$0xff]
  %v138 = vld [vmem:[%s133 + $0x20] sm:$0xff]
  %v139 = vld [vmem:[%s133 + $0x28] sm:$0xff]
  %v140 = vld [vmem:[%s133 + $0x30] sm:$0xff]
  %v141 = vld [vmem:[%s133 + $0x38] sm:$0xff]
  %v142 = vld [vmem:[%s0] sm:$0xff]
  %v143 = vld [vmem:[%s0 + $0x8] sm:$0xff]
  %v144 = vlaneseq
  %v145 = vshrl.u32 %v144, 7
  %v146 = vsub.s32 0, %v145
  %v147 = vrot.slane %v110, %v146
  %v148 = vmul.f32 %v142, %v147
  %v149 = vmul.f32 %v143, %v147
  %v150 = vlaneseq
  %v151 = vshrl.u32 %v150, 7
  %v152 = vsub.s32 1, %v151
  %v153 = vrot.slane %v115, %v152
  %v154 = vadd.f32 %v148, %v153
  %v155 = vadd.f32 %v149, %v153
  %vm158 = vcmask 1046528
  %v159 = vrot.slane %v154, 1
  %v160 = vrot.slane %v155, 1
  %v161 = vsel %vm158, %v159, %v160
  %v162 = vsel %vm22, %v161, 0
  %v164 = vsel %vm22, %v160, 0
  %166 = vmatprep.subr.mxu0 0.0
  %167 = vmatpush1.msra.mxu0 0.0
  %168 = vmatprep.subr.mxu0 0.0
  %169 = vmatpush1.msra.mxu0 0.0
  %170 = vmatprep.subr.mxu0 0.0
  %171 = vmatpush1.msra.mxu0 0.0
  %172 = vmatprep.subr.mxu0 0.0
  %173 = vmatpush1.msra.mxu0 0.0
  %174 = vmatprep.subr.mxu0 0.0
  %175 = vmatpush1.msra.mxu0 0.0
  %176 = vmatprep.subr.mxu0 0.0
  %177 = vmatpush1.msra.mxu0 0.0
  %178 = vmatprep.subr.mxu0 0.0
  %179 = vmatpush1.msra.mxu0 0.0
  %180 = vmatprep.subr.mxu0 0.0
  %181 = vmatpush1.msra.mxu0 0.0
  %182 = vmatprep.subr.mxu0 0.0
  %183 = vmatpush1.msra.mxu0 %v132
  %184 = vmatprep.subr.mxu0 0.0
  %185 = vmatpush1.msra.mxu0 %v131
  %186 = vmatprep.subr.mxu0 0.0
  %187 = vmatpush1.msra.mxu0 %v130
  %188 = vmatprep.subr.mxu0 0.0
  %189 = vmatpush1.msra.mxu0 %v129
  %190 = vmatprep.subr.mxu0 0.0
  %191 = vmatpush1.msra.mxu0 %v128
  %192 = vmatprep.subr.mxu0 0.0
  %193 = vmatpush1.msra.mxu0 %v127
  %194 = vmatprep.subr.mxu0 0.0
  %195 = vmatpush1.msra.mxu0 %v126
  %196 = vmatprep.subr.mxu0 0.0
  %197 = vmatpush1.msra.mxu0 %v125
  %198 = vmatprep.subr.mxu0 0.0
  %199 = vmatpush2.msra.mxu0 0.0
  %200 = vmatprep.subr.mxu0 0.0
  %201 = vmatpush2.msra.mxu0 0.0
  %202 = vmatprep.subr.mxu0 0.0
  %203 = vmatpush2.msra.mxu0 0.0
  %204 = vmatprep.subr.mxu0 0.0
  %205 = vmatpush2.msra.mxu0 0.0
  %206 = vmatprep.subr.mxu0 0.0
  %207 = vmatpush2.msra.mxu0 0.0
  %208 = vmatprep.subr.mxu0 0.0
  %209 = vmatpush2.msra.mxu0 0.0
  %210 = vmatprep.subr.mxu0 0.0
  %211 = vmatpush2.msra.mxu0 0.0
  %212 = vmatprep.subr.mxu0 0.0
  %213 = vmatpush2.msra.mxu0 0.0
  %214 = vmatprep.subr.mxu0 0.0
  %215 = vmatpush2.msra.mxu0 0.0
  %216 = vmatprep.subr.mxu0 0.0
  %217 = vmatpush2.msra.mxu0 0.0
  %218 = vmatprep.subr.mxu0 0.0
  %219 = vmatpush2.msra.mxu0 0.0
  %220 = vmatprep.subr.mxu0 0.0
  %221 = vmatpush2.msra.mxu0 0.0
  %222 = vmatprep.subr.mxu0 0.0
  %223 = vmatpush2.msra.mxu0 0.0
  %224 = vmatprep.subr.mxu0 0.0
  %225 = vmatpush2.msra.mxu0 0.0
  %226 = vmatprep.subr.mxu0 0.0
  %227 = vmatpush2.msra.mxu0 0.0
  %228 = vmatprep.subr.mxu0 0.0
  %229 = vmatpush2.msra.mxu0 0.0
  %230 = vmatprep.mubr.f32.mxu0 0.0
  %231 = vmatmul.mubr.f32.gmra.mxu0 %v162
  %v232 = vpop.f32.mrf.mxu0
  %v233 = vadd.f32 0.0, %v232
  %v234 = vpop.f32.mrf.mxu0
  %235 = vmatprep.mubr.f32.mxu0 0.0
  %236 = vmatmul.mubr.f32.gmra.mxu0 %v164
  %v237 = vpop.f32.mrf.mxu0
  %v238 = vadd.f32 0.0, %v237
  %v239 = vpop.f32.mrf.mxu0
  %240 = vdwg.mxu0
  %v241 = vsel %vm22, %v154, 0
  %v243 = vsel %vm22, %v155, 0
  %245 = vmatprep.subr.mxu0 0.0
  %246 = vmatpush1.msra.mxu0 0.0
  %247 = vmatprep.subr.mxu0 0.0
  %248 = vmatpush1.msra.mxu0 0.0
  %249 = vmatprep.subr.mxu0 0.0
  %250 = vmatpush1.msra.mxu0 0.0
  %251 = vmatprep.subr.mxu0 0.0
  %252 = vmatpush1.msra.mxu0 0.0
  %253 = vmatprep.subr.mxu0 0.0
  %254 = vmatpush1.msra.mxu0 0.0
  %255 = vmatprep.subr.mxu0 0.0
  %256 = vmatpush1.msra.mxu0 0.0
  %257 = vmatprep.subr.mxu0 0.0
  %258 = vmatpush1.msra.mxu0 0.0
  %259 = vmatprep.subr.mxu0 0.0
  %260 = vmatpush1.msra.mxu0 0.0
  %261 = vmatprep.subr.mxu0 0.0
  %262 = vmatpush1.msra.mxu0 %v123
  %263 = vmatprep.subr.mxu0 0.0
  %264 = vmatpush1.msra.mxu0 %v122
  %265 = vmatprep.subr.mxu0 0.0
  %266 = vmatpush1.msra.mxu0 %v121
  %267 = vmatprep.subr.mxu0 0.0
  %268 = vmatpush1.msra.mxu0 %v120
  %269 = vmatprep.subr.mxu0 0.0
  %270 = vmatpush1.msra.mxu0 %v119
  %271 = vmatprep.subr.mxu0 0.0
  %272 = vmatpush1.msra.mxu0 %v118
  %273 = vmatprep.subr.mxu0 0.0
  %274 = vmatpush1.msra.mxu0 %v117
  %275 = vmatprep.subr.mxu0 0.0
  %276 = vmatpush1.msra.mxu0 %v116
  %277 = vmatprep.subr.mxu0 0.0
  %278 = vmatpush2.msra.mxu0 0.0
  %279 = vmatprep.subr.mxu0 0.0
  %280 = vmatpush2.msra.mxu0 0.0
  %281 = vmatprep.subr.mxu0 0.0
  %282 = vmatpush2.msra.mxu0 0.0
  %283 = vmatprep.subr.mxu0 0.0
  %284 = vmatpush2.msra.mxu0 0.0
  %285 = vmatprep.subr.mxu0 0.0
  %286 = vmatpush2.msra.mxu0 0.0
  %287 = vmatprep.subr.mxu0 0.0
  %288 = vmatpush2.msra.mxu0 0.0
  %289 = vmatprep.subr.mxu0 0.0
  %290 = vmatpush2.msra.mxu0 0.0
  %291 = vmatprep.subr.mxu0 0.0
  %292 = vmatpush2.msra.mxu0 0.0
  %293 = vmatprep.subr.mxu0 0.0
  %294 = vmatpush2.msra.mxu0 0.0
  %295 = vmatprep.subr.mxu0 0.0
  %296 = vmatpush2.msra.mxu0 0.0
  %297 = vmatprep.subr.mxu0 0.0
  %298 = vmatpush2.msra.mxu0 0.0
  %299 = vmatprep.subr.mxu0 0.0
  %300 = vmatpush2.msra.mxu0 0.0
  %301 = vmatprep.subr.mxu0 0.0
  %302 = vmatpush2.msra.mxu0 0.0
  %303 = vmatprep.subr.mxu0 0.0
  %304 = vmatpush2.msra.mxu0 0.0
  %305 = vmatprep.subr.mxu0 0.0
  %306 = vmatpush2.msra.mxu0 0.0
  %307 = vmatprep.subr.mxu0 0.0
  %308 = vmatpush2.msra.mxu0 0.0
  %309 = vmatprep.mubr.f32.mxu0 0.0
  %310 = vmatmul.mubr.f32.gmra.mxu0 %v241
  %v311 = vpop.f32.mrf.mxu0
  %v312 = vadd.f32 %v233, %v311
  %v313 = vpop.f32.mrf.mxu0
  %314 = vmatprep.mubr.f32.mxu0 0.0
  %315 = vmatmul.mubr.f32.gmra.mxu0 %v243
  %v316 = vpop.f32.mrf.mxu0
  %v317 = vadd.f32 %v238, %v316
  %v318 = vpop.f32.mrf.mxu0
  %319 = vdwg.mxu0
  %vm320 = vcmask 1045504
  %v321 = vrot.slane %v154, 2
  %v322 = vrot.slane %v155, 2
  %v323 = vsel %vm320, %v321, %v322
  %v324 = vsel %vm22, %v323, 0
  %v326 = vsel %vm22, %v322, 0
  %328 = vmatprep.subr.mxu0 0.0
  %329 = vmatpush1.msra.mxu0 0.0
  %330 = vmatprep.subr.mxu0 0.0
  %331 = vmatpush1.msra.mxu0 0.0
  %332 = vmatprep.subr.mxu0 0.0
  %333 = vmatpush1.msra.mxu0 0.0
  %334 = vmatprep.subr.mxu0 0.0
  %335 = vmatpush1.msra.mxu0 0.0
  %336 = vmatprep.subr.mxu0 0.0
  %337 = vmatpush1.msra.mxu0 0.0
  %338 = vmatprep.subr.mxu0 0.0
  %339 = vmatpush1.msra.mxu0 0.0
  %340 = vmatprep.subr.mxu0 0.0
  %341 = vmatpush1.msra.mxu0 0.0
  %342 = vmatprep.subr.mxu0 0.0
  %343 = vmatpush1.msra.mxu0 0.0
  %344 = vmatprep.subr.mxu0 0.0
  %345 = vmatpush1.msra.mxu0 %v141
  %346 = vmatprep.subr.mxu0 0.0
  %347 = vmatpush1.msra.mxu0 %v140
  %348 = vmatprep.subr.mxu0 0.0
  %349 = vmatpush1.msra.mxu0 %v139
  %350 = vmatprep.subr.mxu0 0.0
  %351 = vmatpush1.msra.mxu0 %v138
  %352 = vmatprep.subr.mxu0 0.0
  %353 = vmatpush1.msra.mxu0 %v137
  %354 = vmatprep.subr.mxu0 0.0
  %355 = vmatpush1.msra.mxu0 %v136
  %356 = vmatprep.subr.mxu0 0.0
  %357 = vmatpush1.msra.mxu0 %v135
  %358 = vmatprep.subr.mxu0 0.0
  %359 = vmatpush1.msra.mxu0 %v134
  %360 = vmatprep.subr.mxu0 0.0
  %361 = vmatpush2.msra.mxu0 0.0
  %362 = vmatprep.subr.mxu0 0.0
  %363 = vmatpush2.msra.mxu0 0.0
  %364 = vmatprep.subr.mxu0 0.0
  %365 = vmatpush2.msra.mxu0 0.0
  %366 = vmatprep.subr.mxu0 0.0
  %367 = vmatpush2.msra.mxu0 0.0
  %368 = vmatprep.subr.mxu0 0.0
  %369 = vmatpush2.msra.mxu0 0.0
  %370 = vmatprep.subr.mxu0 0.0
  %371 = vmatpush2.msra.mxu0 0.0
  %372 = vmatprep.subr.mxu0 0.0
  %373 = vmatpush2.msra.mxu0 0.0
  %374 = vmatprep.subr.mxu0 0.0
  %375 = vmatpush2.msra.mxu0 0.0
  %376 = vmatprep.subr.mxu0 0.0
  %377 = vmatpush2.msra.mxu0 0.0
  %378 = vmatprep.subr.mxu0 0.0
  %379 = vmatpush2.msra.mxu0 0.0
  %380 = vmatprep.subr.mxu0 0.0
  %381 = vmatpush2.msra.mxu0 0.0
  %382 = vmatprep.subr.mxu0 0.0
  %383 = vmatpush2.msra.mxu0 0.0
  %384 = vmatprep.subr.mxu0 0.0
  %385 = vmatpush2.msra.mxu0 0.0
  %386 = vmatprep.subr.mxu0 0.0
  %387 = vmatpush2.msra.mxu0 0.0
  %388 = vmatprep.subr.mxu0 0.0
  %389 = vmatpush2.msra.mxu0 0.0
  %390 = vmatprep.subr.mxu0 0.0
  %391 = vmatpush2.msra.mxu0 0.0
  %392 = vmatprep.mubr.f32.mxu0 0.0
  %393 = vmatmul.mubr.f32.gmra.mxu0 %v324
  %v394 = vpop.f32.mrf.mxu0
  %v395 = vadd.f32 0.0, %v394
  %v396 = vpop.f32.mrf.mxu0
  %397 = vmatprep.mubr.f32.mxu0 0.0
  %398 = vmatmul.mubr.f32.gmra.mxu0 %v326
  %v399 = vpop.f32.mrf.mxu0
  %v400 = vadd.f32 0.0, %v399
  %v401 = vpop.f32.mrf.mxu0
  %402 = vdwg.mxu0
  %v403 = vadd.f32 %v312, %v395
  %v404 = vadd.f32 %v317, %v400
  %v405 = vlaneseq
  %v406 = vshrl.u32 %v405, 7
  %v407 = vsub.s32 2, %v406
  %v408 = vrot.slane %v17, %v407
  %v409 = vadd.f32 %v403, %v408
  %v410 = vadd.f32 %v404, %v408
  %v411 = vmax.f32 %v409, 0.0
  %v412 = vmax.f32 %v410, 0.0
  %vm413 = vcmask 457728
  %414 = vst.msk [vmem:[#allocation2] sm:$0xff] %vm413, %v411
  %vm415 = vcmask 455680
  %416 = vst.msk [vmem:[#allocation2 + $0x8] sm:$0x3f] %vm415, %v412
  %s417 = scalar_lea.vmem %s0, 16
  %v418 = vld [vmem:[%s417] sm:$0xff]
  %v419 = vld [vmem:[%s417 + $0x8] sm:$0xff]
  %v420 = vmul.f32 %v418, %v147
  %v421 = vmul.f32 %v419, %v147
  %v422 = vadd.f32 %v420, %v153
  %v423 = vadd.f32 %v421, %v153
  %v426 = vrot.slane %v422, 1
  %v427 = vrot.slane %v423, 1
  %v428 = vsel %vm158, %v426, %v427
  %v429 = vsel %vm22, %v428, 0
  %v431 = vsel %vm22, %v427, 0
  %433 = vmatprep.subr.mxu0 0.0
  %434 = vmatpush1.msra.mxu0 0.0
  %435 = vmatprep.subr.mxu0 0.0
  %436 = vmatpush1.msra.mxu0 0.0
  %437 = vmatprep.subr.mxu0 0.0
  %438 = vmatpush1.msra.mxu0 0.0
  %439 = vmatprep.subr.mxu0 0.0
  %440 = vmatpush1.msra.mxu0 0.0
  %441 = vmatprep.subr.mxu0 0.0
  %442 = vmatpush1.msra.mxu0 0.0
  %443 = vmatprep.subr.mxu0 0.0
  %444 = vmatpush1.msra.mxu0 0.0
  %445 = vmatprep.subr.mxu0 0.0
  %446 = vmatpush1.msra.mxu0 0.0
  %447 = vmatprep.subr.mxu0 0.0
  %448 = vmatpush1.msra.mxu0 0.0
  %449 = vmatprep.subr.mxu0 0.0
  %450 = vmatpush1.msra.mxu0 %v132
  %451 = vmatprep.subr.mxu0 0.0
  %452 = vmatpush1.msra.mxu0 %v131
  %453 = vmatprep.subr.mxu0 0.0
  %454 = vmatpush1.msra.mxu0 %v130
  %455 = vmatprep.subr.mxu0 0.0
  %456 = vmatpush1.msra.mxu0 %v129
  %457 = vmatprep.subr.mxu0 0.0
  %458 = vmatpush1.msra.mxu0 %v128
  %459 = vmatprep.subr.mxu0 0.0
  %460 = vmatpush1.msra.mxu0 %v127
  %461 = vmatprep.subr.mxu0 0.0
  %462 = vmatpush1.msra.mxu0 %v126
  %463 = vmatprep.subr.mxu0 0.0
  %464 = vmatpush1.msra.mxu0 %v125
  %465 = vmatprep.subr.mxu0 0.0
  %466 = vmatpush2.msra.mxu0 0.0
  %467 = vmatprep.subr.mxu0 0.0
  %468 = vmatpush2.msra.mxu0 0.0
  %469 = vmatprep.subr.mxu0 0.0
  %470 = vmatpush2.msra.mxu0 0.0
  %471 = vmatprep.subr.mxu0 0.0
  %472 = vmatpush2.msra.mxu0 0.0
  %473 = vmatprep.subr.mxu0 0.0
  %474 = vmatpush2.msra.mxu0 0.0
  %475 = vmatprep.subr.mxu0 0.0
  %476 = vmatpush2.msra.mxu0 0.0
  %477 = vmatprep.subr.mxu0 0.0
  %478 = vmatpush2.msra.mxu0 0.0
  %479 = vmatprep.subr.mxu0 0.0
  %480 = vmatpush2.msra.mxu0 0.0
  %481 = vmatprep.subr.mxu0 0.0
  %482 = vmatpush2.msra.mxu0 0.0
  %483 = vmatprep.subr.mxu0 0.0
  %484 = vmatpush2.msra.mxu0 0.0
  %485 = vmatprep.subr.mxu0 0.0
  %486 = vmatpush2.msra.mxu0 0.0
  %487 = vmatprep.subr.mxu0 0.0
  %488 = vmatpush2.msra.mxu0 0.0
  %489 = vmatprep.subr.mxu0 0.0
  %490 = vmatpush2.msra.mxu0 0.0
  %491 = vmatprep.subr.mxu0 0.0
  %492 = vmatpush2.msra.mxu0 0.0
  %493 = vmatprep.subr.mxu0 0.0
  %494 = vmatpush2.msra.mxu0 0.0
  %495 = vmatprep.subr.mxu0 0.0
  %496 = vmatpush2.msra.mxu0 0.0
  %497 = vmatprep.mubr.f32.mxu0 0.0
  %498 = vmatmul.mubr.f32.gmra.mxu0 %v429
  %v499 = vpop.f32.mrf.mxu0
  %v500 = vadd.f32 0.0, %v499
  %v501 = vpop.f32.mrf.mxu0
  %502 = vmatprep.mubr.f32.mxu0 0.0
  %503 = vmatmul.mubr.f32.gmra.mxu0 %v431
  %v504 = vpop.f32.mrf.mxu0
  %v505 = vadd.f32 0.0, %v504
  %v506 = vpop.f32.mrf.mxu0
  %507 = vdwg.mxu0
  %v508 = vsel %vm22, %v422, 0
  %v510 = vsel %vm22, %v423, 0
  %512 = vmatprep.subr.mxu0 0.0
  %513 = vmatpush1.msra.mxu0 0.0
  %514 = vmatprep.subr.mxu0 0.0
  %515 = vmatpush1.msra.mxu0 0.0
  %516 = vmatprep.subr.mxu0 0.0
  %517 = vmatpush1.msra.mxu0 0.0
  %518 = vmatprep.subr.mxu0 0.0
  %519 = vmatpush1.msra.mxu0 0.0
  %520 = vmatprep.subr.mxu0 0.0
  %521 = vmatpush1.msra.mxu0 0.0
  %522 = vmatprep.subr.mxu0 0.0
  %523 = vmatpush1.msra.mxu0 0.0
  %524 = vmatprep.subr.mxu0 0.0
  %525 = vmatpush1.msra.mxu0 0.0
  %526 = vmatprep.subr.mxu0 0.0
  %527 = vmatpush1.msra.mxu0 0.0
  %528 = vmatprep.subr.mxu0 0.0
  %529 = vmatpush1.msra.mxu0 %v123
  %530 = vmatprep.subr.mxu0 0.0
  %531 = vmatpush1.msra.mxu0 %v122
  %532 = vmatprep.subr.mxu0 0.0
  %533 = vmatpush1.msra.mxu0 %v121
  %534 = vmatprep.subr.mxu0 0.0
  %535 = vmatpush1.msra.mxu0 %v120
  %536 = vmatprep.subr.mxu0 0.0
  %537 = vmatpush1.msra.mxu0 %v119
  %538 = vmatprep.subr.mxu0 0.0
  %539 = vmatpush1.msra.mxu0 %v118
  %540 = vmatprep.subr.mxu0 0.0
  %541 = vmatpush1.msra.mxu0 %v117
  %542 = vmatprep.subr.mxu0 0.0
  %543 = vmatpush1.msra.mxu0 %v116
  %544 = vmatprep.subr.mxu0 0.0
  %545 = vmatpush2.msra.mxu0 0.0
  %546 = vmatprep.subr.mxu0 0.0
  %547 = vmatpush2.msra.mxu0 0.0
  %548 = vmatprep.subr.mxu0 0.0
  %549 = vmatpush2.msra.mxu0 0.0
  %550 = vmatprep.subr.mxu0 0.0
  %551 = vmatpush2.msra.mxu0 0.0
  %552 = vmatprep.subr.mxu0 0.0
  %553 = vmatpush2.msra.mxu0 0.0
  %554 = vmatprep.subr.mxu0 0.0
  %555 = vmatpush2.msra.mxu0 0.0
  %556 = vmatprep.subr.mxu0 0.0
  %557 = vmatpush2.msra.mxu0 0.0
  %558 = vmatprep.subr.mxu0 0.0
  %559 = vmatpush2.msra.mxu0 0.0
  %560 = vmatprep.subr.mxu0 0.0
  %561 = vmatpush2.msra.mxu0 0.0
  %562 = vmatprep.subr.mxu0 0.0
  %563 = vmatpush2.msra.mxu0 0.0
  %564 = vmatprep.subr.mxu0 0.0
  %565 = vmatpush2.msra.mxu0 0.0
  %566 = vmatprep.subr.mxu0 0.0
  %567 = vmatpush2.msra.mxu0 0.0
  %568 = vmatprep.subr.mxu0 0.0
  %569 = vmatpush2.msra.mxu0 0.0
  %570 = vmatprep.subr.mxu0 0.0
  %571 = vmatpush2.msra.mxu0 0.0
  %572 = vmatprep.subr.mxu0 0.0
  %573 = vmatpush2.msra.mxu0 0.0
  %574 = vmatprep.subr.mxu0 0.0
  %575 = vmatpush2.msra.mxu0 0.0
  %576 = vmatprep.mubr.f32.mxu0 0.0
  %577 = vmatmul.mubr.f32.gmra.mxu0 %v508
  %v578 = vpop.f32.mrf.mxu0
  %v579 = vadd.f32 %v500, %v578
  %v580 = vpop.f32.mrf.mxu0
  %581 = vmatprep.mubr.f32.mxu0 0.0
  %582 = vmatmul.mubr.f32.gmra.mxu0 %v510
  %v583 = vpop.f32.mrf.mxu0
  %v584 = vadd.f32 %v505, %v583
  %v585 = vpop.f32.mrf.mxu0
  %586 = vdwg.mxu0
  %v587 = vrot.slane %v422, 2
  %v588 = vrot.slane %v423, 2
  %v589 = vsel %vm320, %v587, %v588
  %v590 = vsel %vm22, %v589, 0
  %v592 = vsel %vm22, %v588, 0
  %594 = vmatprep.subr.mxu0 0.0
  %595 = vmatpush1.msra.mxu0 0.0
  %596 = vmatprep.subr.mxu0 0.0
  %597 = vmatpush1.msra.mxu0 0.0
  %598 = vmatprep.subr.mxu0 0.0
  %599 = vmatpush1.msra.mxu0 0.0
  %600 = vmatprep.subr.mxu0 0.0
  %601 = vmatpush1.msra.mxu0 0.0
  %602 = vmatprep.subr.mxu0 0.0
  %603 = vmatpush1.msra.mxu0 0.0
  %604 = vmatprep.subr.mxu0 0.0
  %605 = vmatpush1.msra.mxu0 0.0
  %606 = vmatprep.subr.mxu0 0.0
  %607 = vmatpush1.msra.mxu0 0.0
  %608 = vmatprep.subr.mxu0 0.0
  %609 = vmatpush1.msra.mxu0 0.0
  %610 = vmatprep.subr.mxu0 0.0
  %611 = vmatpush1.msra.mxu0 %v141
  %612 = vmatprep.subr.mxu0 0.0
  %613 = vmatpush1.msra.mxu0 %v140
  %614 = vmatprep.subr.mxu0 0.0
  %615 = vmatpush1.msra.mxu0 %v139
  %616 = vmatprep.subr.mxu0 0.0
  %617 = vmatpush1.msra.mxu0 %v138
  %618 = vmatprep.subr.mxu0 0.0
  %619 = vmatpush1.msra.mxu0 %v137
  %620 = vmatprep.subr.mxu0 0.0
  %621 = vmatpush1.msra.mxu0 %v136
  %622 = vmatprep.subr.mxu0 0.0
  %623 = vmatpush1.msra.mxu0 %v135
  %624 = vmatprep.subr.mxu0 0.0
  %625 = vmatpush1.msra.mxu0 %v134
  %626 = vmatprep.subr.mxu0 0.0
  %627 = vmatpush2.msra.mxu0 0.0
  %628 = vmatprep.subr.mxu0 0.0
  %629 = vmatpush2.msra.mxu0 0.0
  %630 = vmatprep.subr.mxu0 0.0
  %631 = vmatpush2.msra.mxu0 0.0
  %632 = vmatprep.subr.mxu0 0.0
  %633 = vmatpush2.msra.mxu0 0.0
  %634 = vmatprep.subr.mxu0 0.0
  %635 = vmatpush2.msra.mxu0 0.0
  %636 = vmatprep.subr.mxu0 0.0
  %637 = vmatpush2.msra.mxu0 0.0
  %638 = vmatprep.subr.mxu0 0.0
  %639 = vmatpush2.msra.mxu0 0.0
  %640 = vmatprep.subr.mxu0 0.0
  %641 = vmatpush2.msra.mxu0 0.0
  %642 = vmatprep.subr.mxu0 0.0
  %643 = vmatpush2.msra.mxu0 0.0
  %644 = vmatprep.subr.mxu0 0.0
  %645 = vmatpush2.msra.mxu0 0.0
  %646 = vmatprep.subr.mxu0 0.0
  %647 = vmatpush2.msra.mxu0 0.0
  %648 = vmatprep.subr.mxu0 0.0
  %649 = vmatpush2.msra.mxu0 0.0
  %650 = vmatprep.subr.mxu0 0.0
  %651 = vmatpush2.msra.mxu0 0.0
  %652 = vmatprep.subr.mxu0 0.0
  %653 = vmatpush2.msra.mxu0 0.0
  %654 = vmatprep.subr.mxu0 0.0
  %655 = vmatpush2.msra.mxu0 0.0
  %656 = vmatprep.subr.mxu0 0.0
  %657 = vmatpush2.msra.mxu0 0.0
  %658 = vmatprep.mubr.f32.mxu0 0.0
  %659 = vmatmul.mubr.f32.gmra.mxu0 %v590
  %v660 = vpop.f32.mrf.mxu0
  %v661 = vadd.f32 0.0, %v660
  %v662 = vpop.f32.mrf.mxu0
  %663 = vmatprep.mubr.f32.mxu0 0.0
  %664 = vmatmul.mubr.f32.gmra.mxu0 %v592
  %v665 = vpop.f32.mrf.mxu0
  %v666 = vadd.f32 0.0, %v665
  %v667 = vpop.f32.mrf.mxu0
  %668 = vdwg.mxu0
  %v669 = vadd.f32 %v579, %v661
  %v670 = vadd.f32 %v584, %v666
  %v671 = vadd.f32 %v669, %v408
  %v672 = vadd.f32 %v670, %v408
  %v673 = vmax.f32 %v671, 0.0
  %v674 = vmax.f32 %v672, 0.0
  %s675 = scalar_lea.vmem [#allocation2], 16
  %676 = vst.msk [vmem:[%s675] sm:$0xff] %vm413, %v673
  %677 = vst.msk [vmem:[%s675 + $0x8] sm:$0x3f] %vm415, %v674
  %s678 = scalar_lea.vmem %s3, 4
  %v679 = vld [vmem:[%s678] sm:$0x7]
  %v680 = vld [vmem:[#allocation2] sm:$0xff]
  %v681 = vld [vmem:[#allocation2 + $0x8] sm:$0x3f]
  %v682 = vld [vmem:[#allocation2 + $0x10] sm:$0xff]
  %v683 = vld [vmem:[#allocation2 + $0x18] sm:$0x3f]
  %v684 = vsel %vm413, %v680, 0.0
  %v685 = vsel %vm413, %v682, 0.0
  %v686 = vadd.f32 %v684, %v685
  %v687 = vsel %vm415, %v681, 0.0
  %v688 = vsel %vm415, %v683, 0.0
  %v689 = vadd.f32 %v687, %v688
  %v690 = vsel %vm413, %v686, 0.0
  %v691 = vsel %vm415, %v689, 0.0
  %v692 = vadd.f32 %v690, %v691
  %v693 = vrot.slane %v692, 4
  %v694 = vadd.f32 %v692, %v693
  %v695 = vrot.slane %v694, 2
  %v696 = vadd.f32 %v694, %v695
  %v697 = vrot.slane %v696, 1
  %v698 = vadd.f32 %v696, %v697
  %v699 = vmul.f32 %v680, %v680
  %v700 = vmul.f32 %v681, %v681
  %v701 = vmul.f32 %v682, %v682
  %v702 = vmul.f32 %v683, %v683
  %v703 = vsel %vm413, %v699, 0.0
  %v704 = vsel %vm413, %v701, 0.0
  %v705 = vadd.f32 %v703, %v704
  %v706 = vsel %vm415, %v700, 0.0
  %v707 = vsel %vm415, %v702, 0.0
  %v708 = vadd.f32 %v706, %v707
  %v709 = vsel %vm413, %v705, 0.0
  %v710 = vsel %vm415, %v708, 0.0
  %v711 = vadd.f32 %v709, %v710
  %v712 = vrot.slane %v711, 4
  %v713 = vadd.f32 %v711, %v712
  %v714 = vrot.slane %v713, 2
  %v715 = vadd.f32 %v713, %v714
  %v716 = vrot.slane %v715, 1
  %v717 = vadd.f32 %v715, %v716
  %v718 = vsel %vm57, %v698, %v717
  %v719 = vmul.f32 %v718, %v64
  %vm720 = vcmask 451584
  %v721 = vsel %vm720, %v719, 0.0
  %722 = vadd.xlane.f32.xlu0 %v721
  %v723 = vpop.xlane.xlu0 %722
  %v724 = vmul.f32 %v723, %v64
  %v725 = vadd.f32 %v724, 0.0
  %v726 = vmul.f32 %v718, %v74
  %v727 = vsel %vm720, %v726, 0.0
  %728 = vadd.xlane.f32.xlu0 %v727
  %v729 = vpop.xlane.xlu0 %728
  %v730 = vmul.f32 %v729, %v74
  %v731 = vadd.f32 %v725, %v730
  %v732 = vmul.f32 %v718, %v83
  %v733 = vsel %vm720, %v732, 0.0
  %734 = vadd.xlane.f32.xlu0 %v733
  %v735 = vpop.xlane.xlu0 %734
  %v736 = vmul.f32 %v735, %v83
  %v737 = vadd.f32 %v731, %v736
  %v738 = vmul.f32 %v718, %v92
  %v739 = vsel %vm720, %v738, 0.0
  %740 = vadd.xlane.f32.xlu0 %v739
  %v741 = vpop.xlane.xlu0 %740
  %v742 = vmul.f32 %v741, %v92
  %v743 = vadd.f32 %v737, %v742
  %v744 = vmul.f32 %v743, 0.0025510204
  %v745 = vmul.f32 %v744, %v744
  %v747 = vrot.slane %v745, 7
  %v749 = vsub.f32 %v744, %v747
  %v750 = vadd.f32 %v749, 1e-05
  %v751 = vrsqrt.pop %v750
  %v753 = vrot.slane %v751, 1
  %v755 = vmul.f32 %v679, %v753
  %v756 = vmul.f32 %v744, %v755
  %v758 = vrot.slane %v756, 7
  %v760 = vsub.f32 %v679, %v758
  %v761 = vld [vmem:[%s2] sm:$0xff]
  %v762 = vld [vmem:[%s2 + $0x8] sm:$0xff]
  %v763 = vld [vmem:[%s2 + $0x10] sm:$0xff]
  %v764 = vld [vmem:[%s2 + $0x18] sm:$0xff]
  %v765 = vld [vmem:[%s2 + $0x20] sm:$0xff]
  %v766 = vld [vmem:[%s2 + $0x28] sm:$0xff]
  %v767 = vld [vmem:[%s2 + $0x30] sm:$0xff]
  %s768 = scalar_lea.vmem %s2, 56
  %v769 = vld [vmem:[%s768] sm:$0xff]
  %v770 = vld [vmem:[%s768 + $0x8] sm:$0xff]
  %v771 = vld [vmem:[%s768 + $0x10] sm:$0xff]
  %v772 = vld [vmem:[%s768 + $0x18] sm:$0xff]
  %v773 = vld [vmem:[%s768 + $0x20] sm:$0xff]
  %v774 = vld [vmem:[%s768 + $0x28] sm:$0xff]
  %v775 = vld [vmem:[%s768 + $0x30] sm:$0xff]
  %s776 = scalar_lea.vmem %s2, 112
  %v777 = vld [vmem:[%s776] sm:$0xff]
  %v778 = vld [vmem:[%s776 + $0x8] sm:$0xff]
  %v779 = vld [vmem:[%s776 + $0x10] sm:$0xff]
  %v780 = vld [vmem:[%s776 + $0x18] sm:$0xff]
  %v781 = vld [vmem:[%s776 + $0x20] sm:$0xff]
  %v782 = vld [vmem:[%s776 + $0x28] sm:$0xff]
  %v783 = vld [vmem:[%s776 + $0x30] sm:$0xff]
  %v784 = vlaneseq
  %v785 = vshrl.u32 %v784, 7
  %v786 = vsub.s32 0, %v785
  %v787 = vrot.slane %v755, %v786
  %v788 = vmul.f32 %v680, %v787
  %v789 = vmul.f32 %v681, %v787
  %v790 = vlaneseq
  %v791 = vshrl.u32 %v790, 7
  %v792 = vsub.s32 1, %v791
  %v793 = vrot.slane %v760, %v792
  %v794 = vadd.f32 %v788, %v793
  %v795 = vadd.f32 %v789, %v793
  %v798 = vrot.slane %v794, 1
  %v799 = vrot.slane %v795, 1
  %v800 = vsel %vm158, %v798, %v799
  %v801 = vsel %vm413, %v800, 0
  %v803 = vsel %vm413, %v799, 0
  %805 = vmatprep.subr.mxu0 0.0
  %806 = vmatpush1.msra.mxu0 0.0
  %807 = vmatprep.subr.mxu0 0.0
  %808 = vmatpush1.msra.mxu0 0.0
  %809 = vmatprep.subr.mxu0 0.0
  %810 = vmatpush1.msra.mxu0 0.0
  %811 = vmatprep.subr.mxu0 0.0
  %812 = vmatpush1.msra.mxu0 0.0
  %813 = vmatprep.subr.mxu0 0.0
  %814 = vmatpush1.msra.mxu0 0.0
  %815 = vmatprep.subr.mxu0 0.0
  %816 = vmatpush1.msra.mxu0 0.0
  %817 = vmatprep.subr.mxu0 0.0
  %818 = vmatpush1.msra.mxu0 0.0
  %819 = vmatprep.subr.mxu0 0.0
  %820 = vmatpush1.msra.mxu0 0.0
  %821 = vmatprep.subr.mxu0 0.0
  %822 = vmatpush1.msra.mxu0 0.0
  %823 = vmatprep.subr.mxu0 0.0
  %824 = vmatpush1.msra.mxu0 %v775
  %825 = vmatprep.subr.mxu0 0.0
  %826 = vmatpush1.msra.mxu0 %v774
  %827 = vmatprep.subr.mxu0 0.0
  %828 = vmatpush1.msra.mxu0 %v773
  %829 = vmatprep.subr.mxu0 0.0
  %830 = vmatpush1.msra.mxu0 %v772
  %831 = vmatprep.subr.mxu0 0.0
  %832 = vmatpush1.msra.mxu0 %v771
  %833 = vmatprep.subr.mxu0 0.0
  %834 = vmatpush1.msra.mxu0 %v770
  %835 = vmatprep.subr.mxu0 0.0
  %836 = vmatpush1.msra.mxu0 %v769
  %837 = vmatprep.subr.mxu0 0.0
  %838 = vmatpush2.msra.mxu0 0.0
  %839 = vmatprep.subr.mxu0 0.0
  %840 = vmatpush2.msra.mxu0 0.0
  %841 = vmatprep.subr.mxu0 0.0
  %842 = vmatpush2.msra.mxu0 0.0
  %843 = vmatprep.subr.mxu0 0.0
  %844 = vmatpush2.msra.mxu0 0.0
  %845 = vmatprep.subr.mxu0 0.0
  %846 = vmatpush2.msra.mxu0 0.0
  %847 = vmatprep.subr.mxu0 0.0
  %848 = vmatpush2.msra.mxu0 0.0
  %849 = vmatprep.subr.mxu0 0.0
  %850 = vmatpush2.msra.mxu0 0.0
  %851 = vmatprep.subr.mxu0 0.0
  %852 = vmatpush2.msra.mxu0 0.0
  %853 = vmatprep.subr.mxu0 0.0
  %854 = vmatpush2.msra.mxu0 0.0
  %855 = vmatprep.subr.mxu0 0.0
  %856 = vmatpush2.msra.mxu0 0.0
  %857 = vmatprep.subr.mxu0 0.0
  %858 = vmatpush2.msra.mxu0 0.0
  %859 = vmatprep.subr.mxu0 0.0
  %860 = vmatpush2.msra.mxu0 0.0
  %861 = vmatprep.subr.mxu0 0.0
  %862 = vmatpush2.msra.mxu0 0.0
  %863 = vmatprep.subr.mxu0 0.0
  %864 = vmatpush2.msra.mxu0 0.0
  %865 = vmatprep.subr.mxu0 0.0
  %866 = vmatpush2.msra.mxu0 0.0
  %867 = vmatprep.subr.mxu0 0.0
  %868 = vmatpush2.msra.mxu0 0.0
  %869 = vmatprep.mubr.f32.mxu0 0.0
  %870 = vmatmul.mubr.f32.gmra.mxu0 %v801
  %v871 = vpop.f32.mrf.mxu0
  %v872 = vadd.f32 0.0, %v871
  %v873 = vpop.f32.mrf.mxu0
  %874 = vmatprep.mubr.f32.mxu0 0.0
  %875 = vmatmul.mubr.f32.gmra.mxu0 %v803
  %v876 = vpop.f32.mrf.mxu0
  %v877 = vadd.f32 0.0, %v876
  %v878 = vpop.f32.mrf.mxu0
  %879 = vdwg.mxu0
  %v880 = vsel %vm413, %v794, 0
  %v882 = vsel %vm413, %v795, 0
  %884 = vmatprep.subr.mxu0 0.0
  %885 = vmatpush1.msra.mxu0 0.0
  %886 = vmatprep.subr.mxu0 0.0
  %887 = vmatpush1.msra.mxu0 0.0
  %888 = vmatprep.subr.mxu0 0.0
  %889 = vmatpush1.msra.mxu0 0.0
  %890 = vmatprep.subr.mxu0 0.0
  %891 = vmatpush1.msra.mxu0 0.0
  %892 = vmatprep.subr.mxu0 0.0
  %893 = vmatpush1.msra.mxu0 0.0
  %894 = vmatprep.subr.mxu0 0.0
  %895 = vmatpush1.msra.mxu0 0.0
  %896 = vmatprep.subr.mxu0 0.0
  %897 = vmatpush1.msra.mxu0 0.0
  %898 = vmatprep.subr.mxu0 0.0
  %899 = vmatpush1.msra.mxu0 0.0
  %900 = vmatprep.subr.mxu0 0.0
  %901 = vmatpush1.msra.mxu0 0.0
  %902 = vmatprep.subr.mxu0 0.0
  %903 = vmatpush1.msra.mxu0 %v767
  %904 = vmatprep.subr.mxu0 0.0
  %905 = vmatpush1.msra.mxu0 %v766
  %906 = vmatprep.subr.mxu0 0.0
  %907 = vmatpush1.msra.mxu0 %v765
  %908 = vmatprep.subr.mxu0 0.0
  %909 = vmatpush1.msra.mxu0 %v764
  %910 = vmatprep.subr.mxu0 0.0
  %911 = vmatpush1.msra.mxu0 %v763
  %912 = vmatprep.subr.mxu0 0.0
  %913 = vmatpush1.msra.mxu0 %v762
  %914 = vmatprep.subr.mxu0 0.0
  %915 = vmatpush1.msra.mxu0 %v761
  %916 = vmatprep.subr.mxu0 0.0
  %917 = vmatpush2.msra.mxu0 0.0
  %918 = vmatprep.subr.mxu0 0.0
  %919 = vmatpush2.msra.mxu0 0.0
  %920 = vmatprep.subr.mxu0 0.0
  %921 = vmatpush2.msra.mxu0 0.0
  %922 = vmatprep.subr.mxu0 0.0
  %923 = vmatpush2.msra.mxu0 0.0
  %924 = vmatprep.subr.mxu0 0.0
  %925 = vmatpush2.msra.mxu0 0.0
  %926 = vmatprep.subr.mxu0 0.0
  %927 = vmatpush2.msra.mxu0 0.0
  %928 = vmatprep.subr.mxu0 0.0
  %929 = vmatpush2.msra.mxu0 0.0
  %930 = vmatprep.subr.mxu0 0.0
  %931 = vmatpush2.msra.mxu0 0.0
  %932 = vmatprep.subr.mxu0 0.0
  %933 = vmatpush2.msra.mxu0 0.0
  %934 = vmatprep.subr.mxu0 0.0
  %935 = vmatpush2.msra.mxu0 0.0
  %936 = vmatprep.subr.mxu0 0.0
  %937 = vmatpush2.msra.mxu0 0.0
  %938 = vmatprep.subr.mxu0 0.0
  %939 = vmatpush2.msra.mxu0 0.0
  %940 = vmatprep.subr.mxu0 0.0
  %941 = vmatpush2.msra.mxu0 0.0
  %942 = vmatprep.subr.mxu0 0.0
  %943 = vmatpush2.msra.mxu0 0.0
  %944 = vmatprep.subr.mxu0 0.0
  %945 = vmatpush2.msra.mxu0 0.0
  %946 = vmatprep.subr.mxu0 0.0
  %947 = vmatpush2.msra.mxu0 0.0
  %948 = vmatprep.mubr.f32.mxu0 0.0
  %949 = vmatmul.mubr.f32.gmra.mxu0 %v880
  %v950 = vpop.f32.mrf.mxu0
  %v951 = vadd.f32 %v872, %v950
  %v952 = vpop.f32.mrf.mxu0
  %953 = vmatprep.mubr.f32.mxu0 0.0
  %954 = vmatmul.mubr.f32.gmra.mxu0 %v882
  %v955 = vpop.f32.mrf.mxu0
  %v956 = vadd.f32 %v877, %v955
  %v957 = vpop.f32.mrf.mxu0
  %958 = vdwg.mxu0
  %v959 = vrot.slane %v794, 2
  %v960 = vrot.slane %v795, 2
  %v961 = vsel %vm320, %v959, %v960
  %v962 = vsel %vm413, %v961, 0
  %v964 = vsel %vm413, %v960, 0
  %966 = vmatprep.subr.mxu0 0.0
  %967 = vmatpush1.msra.mxu0 0.0
  %968 = vmatprep.subr.mxu0 0.0
  %969 = vmatpush1.msra.mxu0 0.0
  %970 = vmatprep.subr.mxu0 0.0
  %971 = vmatpush1.msra.mxu0 0.0
  %972 = vmatprep.subr.mxu0 0.0
  %973 = vmatpush1.msra.mxu0 0.0
  %974 = vmatprep.subr.mxu0 0.0
  %975 = vmatpush1.msra.mxu0 0.0
  %976 = vmatprep.subr.mxu0 0.0
  %977 = vmatpush1.msra.mxu0 0.0
  %978 = vmatprep.subr.mxu0 0.0
  %979 = vmatpush1.msra.mxu0 0.0
  %980 = vmatprep.subr.mxu0 0.0
  %981 = vmatpush1.msra.mxu0 0.0
  %982 = vmatprep.subr.mxu0 0.0
  %983 = vmatpush1.msra.mxu0 0.0
  %984 = vmatprep.subr.mxu0 0.0
  %985 = vmatpush1.msra.mxu0 %v783
  %986 = vmatprep.subr.mxu0 0.0
  %987 = vmatpush1.msra.mxu0 %v782
  %988 = vmatprep.subr.mxu0 0.0
  %989 = vmatpush1.msra.mxu0 %v781
  %990 = vmatprep.subr.mxu0 0.0
  %991 = vmatpush1.msra.mxu0 %v780
  %992 = vmatprep.subr.mxu0 0.0
  %993 = vmatpush1.msra.mxu0 %v779
  %994 = vmatprep.subr.mxu0 0.0
  %995 = vmatpush1.msra.mxu0 %v778
  %996 = vmatprep.subr.mxu0 0.0
  %997 = vmatpush1.msra.mxu0 %v777
  %998 = vmatprep.subr.mxu0 0.0
  %999 = vmatpush2.msra.mxu0 0.0
  %1000 = vmatprep.subr.mxu0 0.0
  %1001 = vmatpush2.msra.mxu0 0.0
  %1002 = vmatprep.subr.mxu0 0.0
  %1003 = vmatpush2.msra.mxu0 0.0
  %1004 = vmatprep.subr.mxu0 0.0
  %1005 = vmatpush2.msra.mxu0 0.0
  %1006 = vmatprep.subr.mxu0 0.0
  %1007 = vmatpush2.msra.mxu0 0.0
  %1008 = vmatprep.subr.mxu0 0.0
  %1009 = vmatpush2.msra.mxu0 0.0
  %1010 = vmatprep.subr.mxu0 0.0
  %1011 = vmatpush2.msra.mxu0 0.0
  %1012 = vmatprep.subr.mxu0 0.0
  %1013 = vmatpush2.msra.mxu0 0.0
  %1014 = vmatprep.subr.mxu0 0.0
  %1015 = vmatpush2.msra.mxu0 0.0
  %1016 = vmatprep.subr.mxu0 0.0
  %1017 = vmatpush2.msra.mxu0 0.0
  %1018 = vmatprep.subr.mxu0 0.0
  %1019 = vmatpush2.msra.mxu0 0.0
  %1020 = vmatprep.subr.mxu0 0.0
  %1021 = vmatpush2.msra.mxu0 0.0
  %1022 = vmatprep.subr.mxu0 0.0
  %1023 = vmatpush2.msra.mxu0 0.0
  %1024 = vmatprep.subr.mxu0 0.0
  %1025 = vmatpush2.msra.mxu0 0.0
  %1026 = vmatprep.subr.mxu0 0.0
  %1027 = vmatpush2.msra.mxu0 0.0
  %1028 = vmatprep.subr.mxu0 0.0
  %1029 = vmatpush2.msra.mxu0 0.0
  %1030 = vmatprep.mubr.f32.mxu0 0.0
  %1031 = vmatmul.mubr.f32.gmra.mxu0 %v962
  %v1032 = vpop.f32.mrf.mxu0
  %v1033 = vadd.f32 0.0, %v1032
  %v1034 = vpop.f32.mrf.mxu0
  %1035 = vmatprep.mubr.f32.mxu0 0.0
  %1036 = vmatmul.mubr.f32.gmra.mxu0 %v964
  %v1037 = vpop.f32.mrf.mxu0
  %v1038 = vadd.f32 0.0, %v1037
  %v1039 = vpop.f32.mrf.mxu0
  %1040 = vdwg.mxu0
  %v1041 = vadd.f32 %v951, %v1033
  %v1042 = vadd.f32 %v956, %v1038
  %v1043 = vlaneseq
  %v1044 = vshrl.u32 %v1043, 7
  %v1045 = vsub.s32 2, %v1044
  %v1046 = vrot.slane %v679, %v1045
  %v1047 = vadd.f32 %v1041, %v1046
  %v1048 = vadd.f32 %v1042, %v1046
  %v1049 = vmax.f32 %v1047, 0.0
  %v1050 = vmax.f32 %v1048, 0.0
  %vm1051 = vcmask 392192
  %1052 = vst.msk [vmem:[%s4] sm:$0xff] %vm1051, %v1049
  %vm1053 = vcmask 388096
  %1054 = vst.msk [vmem:[%s4 + $0x8] sm:$0xf] %vm1053, %v1050
  %v1055 = vld [vmem:[%s675] sm:$0xff]
  %v1056 = vld [vmem:[%s675 + $0x8] sm:$0x3f]
  %v1057 = vmul.f32 %v1055, %v787
  %v1058 = vmul.f32 %v1056, %v787
  %v1059 = vadd.f32 %v1057, %v793
  %v1060 = vadd.f32 %v1058, %v793
  %v1063 = vrot.slane %v1059, 1
  %v1064 = vrot.slane %v1060, 1
  %v1065 = vsel %vm158, %v1063, %v1064
  %v1066 = vsel %vm413, %v1065, 0
  %v1068 = vsel %vm413, %v1064, 0
  %1070 = vmatprep.subr.mxu0 0.0
  %1071 = vmatpush1.msra.mxu0 0.0
  %1072 = vmatprep.subr.mxu0 0.0
  %1073 = vmatpush1.msra.mxu0 0.0
  %1074 = vmatprep.subr.mxu0 0.0
  %1075 = vmatpush1.msra.mxu0 0.0
  %1076 = vmatprep.subr.mxu0 0.0
  %1077 = vmatpush1.msra.mxu0 0.0
  %1078 = vmatprep.subr.mxu0 0.0
  %1079 = vmatpush1.msra.mxu0 0.0
  %1080 = vmatprep.subr.mxu0 0.0
  %1081 = vmatpush1.msra.mxu0 0.0
  %1082 = vmatprep.subr.mxu0 0.0
  %1083 = vmatpush1.msra.mxu0 0.0
  %1084 = vmatprep.subr.mxu0 0.0
  %1085 = vmatpush1.msra.mxu0 0.0
  %1086 = vmatprep.subr.mxu0 0.0
  %1087 = vmatpush1.msra.mxu0 0.0
  %1088 = vmatprep.subr.mxu0 0.0
  %1089 = vmatpush1.msra.mxu0 %v775
  %1090 = vmatprep.subr.mxu0 0.0
  %1091 = vmatpush1.msra.mxu0 %v774
  %1092 = vmatprep.subr.mxu0 0.0
  %1093 = vmatpush1.msra.mxu0 %v773
  %1094 = vmatprep.subr.mxu0 0.0
  %1095 = vmatpush1.msra.mxu0 %v772
  %1096 = vmatprep.subr.mxu0 0.0
  %1097 = vmatpush1.msra.mxu0 %v771
  %1098 = vmatprep.subr.mxu0 0.0
  %1099 = vmatpush1.msra.mxu0 %v770
  %1100 = vmatprep.subr.mxu0 0.0
  %1101 = vmatpush1.msra.mxu0 %v769
  %1102 = vmatprep.subr.mxu0 0.0
  %1103 = vmatpush2.msra.mxu0 0.0
  %1104 = vmatprep.subr.mxu0 0.0
  %1105 = vmatpush2.msra.mxu0 0.0
  %1106 = vmatprep.subr.mxu0 0.0
  %1107 = vmatpush2.msra.mxu0 0.0
  %1108 = vmatprep.subr.mxu0 0.0
  %1109 = vmatpush2.msra.mxu0 0.0
  %1110 = vmatprep.subr.mxu0 0.0
  %1111 = vmatpush2.msra.mxu0 0.0
  %1112 = vmatprep.subr.mxu0 0.0
  %1113 = vmatpush2.msra.mxu0 0.0
  %1114 = vmatprep.subr.mxu0 0.0
  %1115 = vmatpush2.msra.mxu0 0.0
  %1116 = vmatprep.subr.mxu0 0.0
  %1117 = vmatpush2.msra.mxu0 0.0
  %1118 = vmatprep.subr.mxu0 0.0
  %1119 = vmatpush2.msra.mxu0 0.0
  %1120 = vmatprep.subr.mxu0 0.0
  %1121 = vmatpush2.msra.mxu0 0.0
  %1122 = vmatprep.subr.mxu0 0.0
  %1123 = vmatpush2.msra.mxu0 0.0
  %1124 = vmatprep.subr.mxu0 0.0
  %1125 = vmatpush2.msra.mxu0 0.0
  %1126 = vmatprep.subr.mxu0 0.0
  %1127 = vmatpush2.msra.mxu0 0.0
  %1128 = vmatprep.subr.mxu0 0.0
  %1129 = vmatpush2.msra.mxu0 0.0
  %1130 = vmatprep.subr.mxu0 0.0
  %1131 = vmatpush2.msra.mxu0 0.0
  %1132 = vmatprep.subr.mxu0 0.0
  %1133 = vmatpush2.msra.mxu0 0.0
  %1134 = vmatprep.mubr.f32.mxu0 0.0
  %1135 = vmatmul.mubr.f32.gmra.mxu0 %v1066
  %v1136 = vpop.f32.mrf.mxu0
  %v1137 = vadd.f32 0.0, %v1136
  %v1138 = vpop.f32.mrf.mxu0
  %1139 = vmatprep.mubr.f32.mxu0 0.0
  %1140 = vmatmul.mubr.f32.gmra.mxu0 %v1068
  %v1141 = vpop.f32.mrf.mxu0
  %v1142 = vadd.f32 0.0, %v1141
  %v1143 = vpop.f32.mrf.mxu0
  %1144 = vdwg.mxu0
  %v1145 = vsel %vm413, %v1059, 0
  %v1147 = vsel %vm413, %v1060, 0
  %1149 = vmatprep.subr.mxu0 0.0
  %1150 = vmatpush1.msra.mxu0 0.0
  %1151 = vmatprep.subr.mxu0 0.0
  %1152 = vmatpush1.msra.mxu0 0.0
  %1153 = vmatprep.subr.mxu0 0.0
  %1154 = vmatpush1.msra.mxu0 0.0
  %1155 = vmatprep.subr.mxu0 0.0
  %1156 = vmatpush1.msra.mxu0 0.0
  %1157 = vmatprep.subr.mxu0 0.0
  %1158 = vmatpush1.msra.mxu0 0.0
  %1159 = vmatprep.subr.mxu0 0.0
  %1160 = vmatpush1.msra.mxu0 0.0
  %1161 = vmatprep.subr.mxu0 0.0
  %1162 = vmatpush1.msra.mxu0 0.0
  %1163 = vmatprep.subr.mxu0 0.0
  %1164 = vmatpush1.msra.mxu0 0.0
  %1165 = vmatprep.subr.mxu0 0.0
  %1166 = vmatpush1.msra.mxu0 0.0
  %1167 = vmatprep.subr.mxu0 0.0
  %1168 = vmatpush1.msra.mxu0 %v767
  %1169 = vmatprep.subr.mxu0 0.0
  %1170 = vmatpush1.msra.mxu0 %v766
  %1171 = vmatprep.subr.mxu0 0.0
  %1172 = vmatpush1.msra.mxu0 %v765
  %1173 = vmatprep.subr.mxu0 0.0
  %1174 = vmatpush1.msra.mxu0 %v764
  %1175 = vmatprep.subr.mxu0 0.0
  %1176 = vmatpush1.msra.mxu0 %v763
  %1177 = vmatprep.subr.mxu0 0.0
  %1178 = vmatpush1.msra.mxu0 %v762
  %1179 = vmatprep.subr.mxu0 0.0
  %1180 = vmatpush1.msra.mxu0 %v761
  %1181 = vmatprep.subr.mxu0 0.0
  %1182 = vmatpush2.msra.mxu0 0.0
  %1183 = vmatprep.subr.mxu0 0.0
  %1184 = vmatpush2.msra.mxu0 0.0
  %1185 = vmatprep.subr.mxu0 0.0
  %1186 = vmatpush2.msra.mxu0 0.0
  %1187 = vmatprep.subr.mxu0 0.0
  %1188 = vmatpush2.msra.mxu0 0.0
  %1189 = vmatprep.subr.mxu0 0.0
  %1190 = vmatpush2.msra.mxu0 0.0
  %1191 = vmatprep.subr.mxu0 0.0
  %1192 = vmatpush2.msra.mxu0 0.0
  %1193 = vmatprep.subr.mxu0 0.0
  %1194 = vmatpush2.msra.mxu0 0.0
  %1195 = vmatprep.subr.mxu0 0.0
  %1196 = vmatpush2.msra.mxu0 0.0
  %1197 = vmatprep.subr.mxu0 0.0
  %1198 = vmatpush2.msra.mxu0 0.0
  %1199 = vmatprep.subr.mxu0 0.0
  %1200 = vmatpush2.msra.mxu0 0.0
  %1201 = vmatprep.subr.mxu0 0.0
  %1202 = vmatpush2.msra.mxu0 0.0
  %1203 = vmatprep.subr.mxu0 0.0
  %1204 = vmatpush2.msra.mxu0 0.0
  %1205 = vmatprep.subr.mxu0 0.0
  %1206 = vmatpush2.msra.mxu0 0.0
  %1207 = vmatprep.subr.mxu0 0.0
  %1208 = vmatpush2.msra.mxu0 0.0
  %1209 = vmatprep.subr.mxu0 0.0
  %1210 = vmatpush2.msra.mxu0 0.0
  %1211 = vmatprep.subr.mxu0 0.0
  %1212 = vmatpush2.msra.mxu0 0.0
  %1213 = vmatprep.mubr.f32.mxu0 0.0
  %1214 = vmatmul.mubr.f32.gmra.mxu0 %v1145
  %v1215 = vpop.f32.mrf.mxu0
  %v1216 = vadd.f32 %v1137, %v1215
  %v1217 = vpop.f32.mrf.mxu0
  %1218 = vmatprep.mubr.f32.mxu0 0.0
  %1219 = vmatmul.mubr.f32.gmra.mxu0 %v1147
  %v1220 = vpop.f32.mrf.mxu0
  %v1221 = vadd.f32 %v1142, %v1220
  %v1222 = vpop.f32.mrf.mxu0
  %1223 = vdwg.mxu0
  %v1224 = vrot.slane %v1059, 2
  %v1225 = vrot.slane %v1060, 2
  %v1226 = vsel %vm320, %v1224, %v1225
  %v1227 = vsel %vm413, %v1226, 0
  %v1229 = vsel %vm413, %v1225, 0
  %1231 = vmatprep.subr.mxu0 0.0
  %1232 = vmatpush1.msra.mxu0 0.0
  %1233 = vmatprep.subr.mxu0 0.0
  %1234 = vmatpush1.msra.mxu0 0.0
  %1235 = vmatprep.subr.mxu0 0.0
  %1236 = vmatpush1.msra.mxu0 0.0
  %1237 = vmatprep.subr.mxu0 0.0
  %1238 = vmatpush1.msra.mxu0 0.0
  %1239 = vmatprep.subr.mxu0 0.0
  %1240 = vmatpush1.msra.mxu0 0.0
  %1241 = vmatprep.subr.mxu0 0.0
  %1242 = vmatpush1.msra.mxu0 0.0
  %1243 = vmatprep.subr.mxu0 0.0
  %1244 = vmatpush1.msra.mxu0 0.0
  %1245 = vmatprep.subr.mxu0 0.0
  %1246 = vmatpush1.msra.mxu0 0.0
  %1247 = vmatprep.subr.mxu0 0.0
  %1248 = vmatpush1.msra.mxu0 0.0
  %1249 = vmatprep.subr.mxu0 0.0
  %1250 = vmatpush1.msra.mxu0 %v783
  %1251 = vmatprep.subr.mxu0 0.0
  %1252 = vmatpush1.msra.mxu0 %v782
  %1253 = vmatprep.subr.mxu0 0.0
  %1254 = vmatpush1.msra.mxu0 %v781
  %1255 = vmatprep.subr.mxu0 0.0
  %1256 = vmatpush1.msra.mxu0 %v780
  %1257 = vmatprep.subr.mxu0 0.0
  %1258 = vmatpush1.msra.mxu0 %v779
  %1259 = vmatprep.subr.mxu0 0.0
  %1260 = vmatpush1.msra.mxu0 %v778
  %1261 = vmatprep.subr.mxu0 0.0
  %1262 = vmatpush1.msra.mxu0 %v777
  %1263 = vmatprep.subr.mxu0 0.0
  %1264 = vmatpush2.msra.mxu0 0.0
  %1265 = vmatprep.subr.mxu0 0.0
  %1266 = vmatpush2.msra.mxu0 0.0
  %1267 = vmatprep.subr.mxu0 0.0
  %1268 = vmatpush2.msra.mxu0 0.0
  %1269 = vmatprep.subr.mxu0 0.0
  %1270 = vmatpush2.msra.mxu0 0.0
  %1271 = vmatprep.subr.mxu0 0.0
  %1272 = vmatpush2.msra.mxu0 0.0
  %1273 = vmatprep.subr.mxu0 0.0
  %1274 = vmatpush2.msra.mxu0 0.0
  %1275 = vmatprep.subr.mxu0 0.0
  %1276 = vmatpush2.msra.mxu0 0.0
  %1277 = vmatprep.subr.mxu0 0.0
  %1278 = vmatpush2.msra.mxu0 0.0
  %1279 = vmatprep.subr.mxu0 0.0
  %1280 = vmatpush2.msra.mxu0 0.0
  %1281 = vmatprep.subr.mxu0 0.0
  %1282 = vmatpush2.msra.mxu0 0.0
  %1283 = vmatprep.subr.mxu0 0.0
  %1284 = vmatpush2.msra.mxu0 0.0
  %1285 = vmatprep.subr.mxu0 0.0
  %1286 = vmatpush2.msra.mxu0 0.0
  %1287 = vmatprep.subr.mxu0 0.0
  %1288 = vmatpush2.msra.mxu0 0.0
  %1289 = vmatprep.subr.mxu0 0.0
  %1290 = vmatpush2.msra.mxu0 0.0
  %1291 = vmatprep.subr.mxu0 0.0
  %1292 = vmatpush2.msra.mxu0 0.0
  %1293 = vmatprep.subr.mxu0 0.0
  %1294 = vmatpush2.msra.mxu0 0.0
  %1295 = vmatprep.mubr.f32.mxu0 0.0
  %1296 = vmatmul.mubr.f32.gmra.mxu0 %v1227
  %v1297 = vpop.f32.mrf.mxu0
  %v1298 = vadd.f32 0.0, %v1297
  %v1299 = vpop.f32.mrf.mxu0
  %1300 = vmatprep.mubr.f32.mxu0 0.0
  %1301 = vmatmul.mubr.f32.gmra.mxu0 %v1229
  %v1302 = vpop.f32.mrf.mxu0
  %v1303 = vadd.f32 0.0, %v1302
  %v1304 = vpop.f32.mrf.mxu0
  %1305 = vdwg.mxu0
  %v1306 = vadd.f32 %v1216, %v1298
  %v1307 = vadd.f32 %v1221, %v1303
  %v1308 = vadd.f32 %v1306, %v1046
  %v1309 = vadd.f32 %v1307, %v1046
  %v1310 = vmax.f32 %v1308, 0.0
  %v1311 = vmax.f32 %v1309, 0.0
  %s1312 = scalar_lea.vmem %s4, 16
  %1313 = vst.msk [vmem:[%s1312] sm:$0xff] %vm1051, %v1310
  %1314 = vst.msk [vmem:[%s1312 + $0x8] sm:$0xf] %vm1053, %v1311
  // Predicated region
  $region18: #{dense_block_forward.1} parent=0 // pred_check
    _
  $region19: #{dense_block_forward.1} parent=0 // pred_check_branch
    %1316 = sbr.rel (0) target = $region21
  $region20: #{dense_block_forward.1} parent=0 // pred_region
    _
  $region21: #{dense_block_forward.1} parent=0 // pred_fallthru
    _
  // Predicated region
  $region22: #{dense_block_forward.1} parent=0 // pred_check
    _
  $region23: #{dense_block_forward.1} parent=0 // pred_check_branch
    %1318 = sbr.rel (0) target = $region25
  $region24: #{dense_block_forward.1} parent=0 // pred_region
    _
  $region25: #{dense_block_forward.1} parent=0 // pred_fallthru
    _

</llo_original>
